<compile_context>
chip_gen: v7x
topology: tpu7x:2x2x1
jax: 0.10.0
libtpu: 0.0.40
codegen_flags: <defaults>
</compile_context>

<pallas_src>
import functools

import jax
import jax.numpy as jnp
from jax.experimental import pallas as pl
from jax.experimental.pallas import tpu as pltpu


def _head_group_size(num_heads: int, head_dim: int, target_lane_width: int = 256) -> int:
    """Smallest G dividing num_heads with G*head_dim >= target and a multiple of 128.

    target_lane_width=256 keeps the 256-wide MXUs (v6e/v7x) fed; 128 is already
    enough on v5e's 128x128 MXUs (pass 128 there to halve per-step temporaries).
    Falls back to processing all heads in one grid step when no grouping exists.
    """
    for g in range(1, num_heads):
        if num_heads % g:
            continue
        gd = g * head_dim
        if gd >= target_lane_width and gd % 128 == 0:
            return g
    return num_heads


def _device_vmem_bytes(default_bytes: int = 64 * 1024 * 1024) -> int:
    """Physical VMEM capacity of the current TPU; conservative 64 MiB fallback."""
    try:
        cap = getattr(pltpu.get_tpu_info(), "vmem_capacity_bytes", None)
        if cap:
            return int(cap)
    except Exception:
        pass
    return default_bytes


def _attn_kernel(x_ref, wq_ref, wk_ref, wv_ref, wp_ref, bp_ref, o_ref, outg_ref,
                 *, group_size, head_dim, num_groups):
    """One (batch, head-group) step of multi-head attention + its output-proj slice.

    x_ref   : (1, N, C)        tokens for this batch element (refetched per batch only)
    wq_ref  : (1, C, G*D)      q_proj.weight^T * scale for THIS head group (streamed)
    wk_ref  : (1, C, G*D)      k_proj.weight^T for this group (streamed)
    wv_ref  : (1, C, G*D)      v_proj.weight^T for this group (streamed)
    wp_ref  : (1, G*D, C)      proj.weight^T rows for this group (streamed)
    bp_ref  : (1, C)           proj bias
    o_ref   : (1, N, C) f32    output block, resident across g; accumulated in place
    outg_ref: (N, G*D) f32     per-group attention-output scratch (bounds per-head
                               score live ranges to ~one (N, N) matrix)
    """
    g = pl.program_id(1)
    G, D = group_size, head_dim

    x = x_ref[0]                        # (N, C), MXU operand dtype (bf16 or f32)
    mx_dtype = x.dtype

    wq_g = wq_ref[0]                    # (C, G*D)   (scale already folded in)
    wk_g = wk_ref[0]
    wv_g = wv_ref[0]
    wp_g = wp_ref[0]                    # (G*D, C)

    # Head-group projections: (N, C) @ (C, G*D) -> (N, G*D), f32 accumulation on the MXU.
    q = jnp.dot(x, wq_g, preferred_element_type=jnp.float32)
    k = jnp.dot(x, wk_g, preferred_element_type=jnp.float32)
    v = jnp.dot(x, wv_g, preferred_element_type=jnp.float32)

    # Per-head attention within the group (G is a compile-time constant; each head's
    # (N, D) result is stored into outg_ref so score/exp temporaries die head-by-head).
    for hi in range(G):
        sl = slice(hi * D, (hi + 1) * D)
        qh = q[:, sl].astype(mx_dtype)
        kh = k[:, sl].astype(mx_dtype)
        vh = v[:, sl].astype(mx_dtype)

        # scores: (N, D) x (N, D) contracted on D -> (N, N), f32.
        # NOTE: rhs contracts on dim 1 (same pattern as the stock flash kernels);
        # if the bundle ever shows a vxpose here, materialize k transposed per group.
        s = jax.lax.dot_general(qh, kh, (((1,), (1,)), ((), ())),
                                preferred_element_type=jnp.float32)

        # Softmax over keys (f32) with DEFERRED normalization: feed unnormalized
        # probabilities to the PV matmul and scale the (N, D) result instead of
        # the (N, N) matrix.
        m = jnp.max(s, axis=-1, keepdims=True)
        p = jnp.exp(s - m)                               # unnormalized probs
        denom = jnp.sum(p, axis=-1, keepdims=True)
        r = pl.reciprocal(denom, approx=True)            # EUP vrcp (free slot)
        r = r * (2.0 - denom * r)                        # one Newton step, O(N)

        pv = jnp.dot(p.astype(mx_dtype), vh,
                     preferred_element_type=jnp.float32)  # (N, D)
        outg_ref[:, sl] = pv * r                          # O(N*D) normalization

    # This group's slice of the output projection: (N, G*D) @ (G*D, C) -> (N, C).
    contrib = jnp.dot(outg_ref[...].astype(mx_dtype), wp_g,
                      preferred_element_type=jnp.float32)
    bias = bp_ref[...].astype(jnp.float32)                # (1, C), broadcasts

    # Accumulate directly in the resident f32 output block (no extra scratch / copy).
    if num_groups == 1:
        o_ref[0] = contrib + bias
    else:
        @pl.when(g == 0)
        def _():
            o_ref[0] = contrib + bias

        @pl.when(g > 0)
        def _():
            o_ref[0] = o_ref[0] + contrib


def attention_forward(x, wq, wk, wv, wp, bp, *, num_heads,
                      compute_dtype=jnp.bfloat16, target_lane_width=256):
    """x: (B, N, C). wq/wk/wv/wp: (C, C) nn.Linear weights. bp: (C,) proj bias.

    compute_dtype controls the dtype fed to the MXU.  bfloat16 (default) is the
    production path (all three TPU generations are bf16-native); float32 gives
    near-exact parity with the PyTorch module.  Softmax math and all accumulation
    stay in float32 either way; the output is float32.
    """
    B, N, C = x.shape
    assert C % num_heads == 0
    D = C // num_heads
    scale = D ** (-0.5)

    G = _head_group_size(num_heads, D, target_lane_width)
    num_groups = num_heads // G
    GD = G * D

    cdt = jnp.dtype(compute_dtype)

    # Host-side weight prep (free at trace time):
    #  - transpose to K-major so in-kernel matmuls contract on the RHS's first dim,
    #  - fold the softmax scale into the q projection,
    #  - group head columns/rows along a leading dim so the kernel streams one
    #    group block per grid step (no dynamic lane slicing).
    wqT = (wq.astype(jnp.float32) * scale).T                   # (C_in, C_out)
    wkT = wk.astype(jnp.float32).T
    wvT = wv.astype(jnp.float32).T
    wpT = wp.astype(jnp.float32).T                             # (C_in=attn feats, C_out)

    def group_cols(wT):                                        # (C, C) -> (num_groups, C, GD)
        return wT.reshape(C, num_groups, GD).transpose(1, 0, 2).astype(cdt)

    wq3 = group_cols(wqT)
    wk3 = group_cols(wkT)
    wv3 = group_cols(wvT)
    wp3 = wpT.reshape(num_groups, GD, C).astype(cdt)           # rows grouped by head group
    bp2 = bp.reshape(1, C).astype(jnp.float32)
    x_c = x.astype(cdt)

    kernel = functools.partial(_attn_kernel, group_size=G, head_dim=D,
                               num_groups=num_groups)

    # VMEM budget (per-group streamed weights, honest score-temporary count) with
    # headroom, clamped to the physical capacity of this generation (v7x: 64 MiB).
    itemsize = cdt.itemsize
    est = (2 * 4 * C * GD * itemsize     # 4 weight blocks, double-buffered, streamed
           + 2 * N * C * itemsize        # x block (double-buffered)
           + 2 * N * C * 4               # f32 output block (double-buffered)
           + N * GD * 4                  # out_g scratch
           + 3 * N * GD * 4              # q/k/v f32
           + 3 * N * GD * itemsize       # MXU-operand casts of q/k/v head slices
           + 3 * N * N * 4               # score/exp temporaries (~2 live + slack)
           + N * C * 4                   # proj contribution
           + 2 * C * 4)                  # bias
    cap = _device_vmem_bytes()
    vmem_limit = int(min(max(int(1.25 * est), 32 * 1024 * 1024),
                         cap - 8 * 1024 * 1024))
    vmem_limit = max(vmem_limit, 16 * 1024 * 1024)

    grid_spec = pltpu.PrefetchScalarGridSpec(
        num_scalar_prefetch=0,
        grid=(B, num_groups),
        in_specs=[
            pl.BlockSpec((1, N, C), lambda b, g: (b, 0, 0)),     # x: refetched per batch only
            pl.BlockSpec((1, C, GD), lambda b, g: (g, 0, 0)),    # wq^T*scale, streamed per group
            pl.BlockSpec((1, C, GD), lambda b, g: (g, 0, 0)),    # wk^T, streamed
            pl.BlockSpec((1, C, GD), lambda b, g: (g, 0, 0)),    # wv^T, streamed
            pl.BlockSpec((1, GD, C), lambda b, g: (g, 0, 0)),    # wp^T rows, streamed
            pl.BlockSpec((1, C), lambda b, g: (0, 0)),           # proj bias
        ],
        out_specs=pl.BlockSpec((1, N, C), lambda b, g: (b, 0, 0)),  # resident across g
        scratch_shapes=[pltpu.VMEM((N, GD), jnp.float32)],          # per-group head outputs
    )

    return pl.pallas_call(
        kernel,
        out_shape=jax.ShapeDtypeStruct((B, N, C), jnp.float32),
        grid_spec=grid_spec,
        compiler_params=pltpu.CompilerParams(
            dimension_semantics=("parallel", "arbitrary"),
            vmem_limit_bytes=vmem_limit,
        ),
    )(x_c, wq3, wk3, wv3, wp3, bp2)


def attention_reference(x, wq, wk, wv, wp, bp, *, num_heads):
    """Pure-JAX reference mirroring the PyTorch forward."""
    B, N, C = x.shape
    D = C // num_heads
    scale = D ** (-0.5)

    q = x @ wq.T
    k = x @ wk.T
    v = x @ wv.T

    def split_heads(t):  # (B, N, C) -> (B*H, N, D)
        return t.reshape(B, N, num_heads, D).transpose(0, 2, 1, 3).reshape(B * num_heads, N, D)

    q, k, v = split_heads(q), split_heads(k), split_heads(v)
    attn = jnp.einsum("bnd,bmd->bnm", q, k) * scale
    attn = jax.nn.softmax(attn, axis=-1)
    out = jnp.einsum("bnm,bmd->bnd", attn, v)
    out = out.reshape(B, num_heads, N, D).transpose(0, 2, 1, 3).reshape(B, N, C)
    return out @ wp.T + bp


def _make_inputs(key, B, N, C):
    kx, kq, kk, kv, kp, kb = jax.random.split(key, 6)
    x = jax.random.normal(kx, (B, N, C), dtype=jnp.float32)
    # nn.Linear weight shape: (out_features, in_features). qkv_bias=False; proj has bias.
    wq = jax.random.normal(kq, (C, C), dtype=jnp.float32) * (C ** -0.5)
    wk = jax.random.normal(kk, (C, C), dtype=jnp.float32) * (C ** -0.5)
    wv = jax.random.normal(kv, (C, C), dtype=jnp.float32) * (C ** -0.5)
    wp = jax.random.normal(kp, (C, C), dtype=jnp.float32) * (C ** -0.5)
    bp = jax.random.normal(kb, (C,), dtype=jnp.float32) * 0.1
    return x, wq, wk, wv, wp, bp


if __name__ == "__main__":
    key = jax.random.PRNGKey(0)
    k1, k2 = jax.random.split(key)

    # --- Test 1: module-sized toy shapes (single head group, GD == C) ---
    B, N, C, H = 2, 8, 64, 8
    x, wq, wk, wv, wp, bp = _make_inputs(k1, B, N, C)
    ref = attention_reference(x, wq, wk, wv, wp, bp, num_heads=H)

    # bf16 MXU-operand production path (default).
    out_bf16 = jax.block_until_ready(attention_forward(x, wq, wk, wv, wp, bp, num_heads=H))
    assert out_bf16.shape == (B, N, C)
    assert jnp.allclose(out_bf16, ref, atol=1e-1, rtol=1e-1), (
        f"bf16 path: max abs err = {jnp.max(jnp.abs(out_bf16 - ref))}")

    # f32 parity/debug path.
    out_f32 = jax.block_until_ready(
        attention_forward(x, wq, wk, wv, wp, bp, num_heads=H, compute_dtype=jnp.float32))
    assert jnp.allclose(out_f32, ref, atol=1e-3, rtol=1e-3), (
        f"f32 path: max abs err = {jnp.max(jnp.abs(out_f32 - ref))}")

    # --- Test 2: multi-group path (num_groups > 1), exercises streamed weights and
    #             in-place output accumulation across the head-group axis ---
    B2, N2, C2, H2 = 2, 16, 512, 8          # D=64, G=4, num_groups=2
    x2, wq2, wk2, wv2, wp2, bp2 = _make_inputs(k2, B2, N2, C2)
    ref2 = attention_reference(x2, wq2, wk2, wv2, wp2, bp2, num_heads=H2)

    out2_f32 = jax.block_until_ready(
        attention_forward(x2, wq2, wk2, wv2, wp2, bp2, num_heads=H2,
                          compute_dtype=jnp.float32))
    assert jnp.allclose(out2_f32, ref2, atol=1e-3, rtol=1e-3), (
        f"f32 multi-group: max abs err = {jnp.max(jnp.abs(out2_f32 - ref2))}")

    out2_bf16 = jax.block_until_ready(
        attention_forward(x2, wq2, wk2, wv2, wp2, bp2, num_heads=H2))
    assert jnp.allclose(out2_bf16, ref2, atol=2e-1, rtol=2e-1), (
        f"bf16 multi-group: max abs err = {jnp.max(jnp.abs(out2_bf16 - ref2))}")

    print("KERNEL_OK")
</pallas_src>

<mosaic_0001>
module attributes {stable_mosaic.version = 11 : i64} {
  func.func @_attn_kernel(%arg0: i32, %arg1: i32, %arg2: memref<1x8x64xbf16, #tpu.memory_space<vmem>>, %arg3: memref<1x64x64xbf16, #tpu.memory_space<vmem>>, %arg4: memref<1x64x64xbf16, #tpu.memory_space<vmem>>, %arg5: memref<1x64x64xbf16, #tpu.memory_space<vmem>>, %arg6: memref<1x64x64xbf16, #tpu.memory_space<vmem>>, %arg7: memref<1x64xf32, #tpu.memory_space<vmem>>, %arg8: memref<1x8x64xf32, #tpu.memory_space<vmem>>, %arg9: memref<8x64xf32, #tpu.memory_space<vmem>>) attributes {dimension_semantics = [#tpu.dimension_semantics<parallel>, #tpu.dimension_semantics<arbitrary>], iteration_bounds = array<i64: 2, 1>, scalar_prefetch = 0 : i64, scratch_operands = 1 : i64, tpu.core_type = #tpu.core_type<tc>, window_params = [{transform_indices = @transform_0, window_bounds = array<i64: 1, 8, 64>}, {transform_indices = @transform_1, window_bounds = array<i64: 1, 64, 64>}, {transform_indices = @transform_2, window_bounds = array<i64: 1, 64, 64>}, {transform_indices = @transform_3, window_bounds = array<i64: 1, 64, 64>}, {transform_indices = @transform_4, window_bounds = array<i64: 1, 64, 64>}, {pipeline_mode = #tpu.pipeline_mode<synchronous>, transform_indices = @transform_5, window_bounds = array<i64: 1, 64>}, {transform_indices = @transform_6, window_bounds = array<i64: 1, 8, 64>}]} {
    %c0 = arith.constant 0 : index
    %c0_0 = arith.constant 0 : index
    %c0_1 = arith.constant 0 : index
    %0 = vector.load %arg2[%c0, %c0_0, %c0_1] : memref<1x8x64xbf16, #tpu.memory_space<vmem>>, vector<1x8x64xbf16>
    %1 = vector.shape_cast %0 : vector<1x8x64xbf16> to vector<8x64xbf16>
    %c0_2 = arith.constant 0 : index
    %c0_3 = arith.constant 0 : index
    %c0_4 = arith.constant 0 : index
    %2 = vector.load %arg3[%c0_2, %c0_3, %c0_4] : memref<1x64x64xbf16, #tpu.memory_space<vmem>>, vector<1x64x64xbf16>
    %3 = vector.shape_cast %2 : vector<1x64x64xbf16> to vector<64x64xbf16>
    %c0_5 = arith.constant 0 : index
    %c0_6 = arith.constant 0 : index
    %c0_7 = arith.constant 0 : index
    %4 = vector.load %arg4[%c0_5, %c0_6, %c0_7] : memref<1x64x64xbf16, #tpu.memory_space<vmem>>, vector<1x64x64xbf16>
    %5 = vector.shape_cast %4 : vector<1x64x64xbf16> to vector<64x64xbf16>
    %c0_8 = arith.constant 0 : index
    %c0_9 = arith.constant 0 : index
    %c0_10 = arith.constant 0 : index
    %6 = vector.load %arg5[%c0_8, %c0_9, %c0_10] : memref<1x64x64xbf16, #tpu.memory_space<vmem>>, vector<1x64x64xbf16>
    %7 = vector.shape_cast %6 : vector<1x64x64xbf16> to vector<64x64xbf16>
    %c0_11 = arith.constant 0 : index
    %c0_12 = arith.constant 0 : index
    %c0_13 = arith.constant 0 : index
    %8 = vector.load %arg6[%c0_11, %c0_12, %c0_13] : memref<1x64x64xbf16, #tpu.memory_space<vmem>>, vector<1x64x64xbf16>
    %9 = vector.shape_cast %8 : vector<1x64x64xbf16> to vector<64x64xbf16>
    %cst = arith.constant dense<0.000000e+00> : vector<8x64xf32>
    %10 = tpu.matmul %1, %3, %cst {dimension_numbers = #tpu.dot_dimension_numbers<[1], [0], [0], [1], [0, 0, 1, 1], [], []>} : vector<8x64xbf16>, vector<64x64xbf16>, vector<8x64xf32> -> vector<8x64xf32>
    %cst_14 = arith.constant dense<0.000000e+00> : vector<8x64xf32>
    %11 = tpu.matmul %1, %5, %cst_14 {dimension_numbers = #tpu.dot_dimension_numbers<[1], [0], [0], [1], [0, 0, 1, 1], [], []>} : vector<8x64xbf16>, vector<64x64xbf16>, vector<8x64xf32> -> vector<8x64xf32>
    %cst_15 = arith.constant dense<0.000000e+00> : vector<8x64xf32>
    %12 = tpu.matmul %1, %7, %cst_15 {dimension_numbers = #tpu.dot_dimension_numbers<[1], [0], [0], [1], [0, 0, 1, 1], [], []>} : vector<8x64xbf16>, vector<64x64xbf16>, vector<8x64xf32> -> vector<8x64xf32>
    %13 = vector.extract_strided_slice %10 {offsets = [0, 0], sizes = [8, 8], strides = [1, 1]} : vector<8x64xf32> to vector<8x8xf32>
    %14 = arith.truncf %13 : vector<8x8xf32> to vector<8x8xbf16>
    %15 = vector.extract_strided_slice %11 {offsets = [0, 0], sizes = [8, 8], strides = [1, 1]} : vector<8x64xf32> to vector<8x8xf32>
    %16 = arith.truncf %15 : vector<8x8xf32> to vector<8x8xbf16>
    %17 = vector.extract_strided_slice %12 {offsets = [0, 0], sizes = [8, 8], strides = [1, 1]} : vector<8x64xf32> to vector<8x8xf32>
    %18 = arith.truncf %17 : vector<8x8xf32> to vector<8x8xbf16>
    %cst_16 = arith.constant dense<0.000000e+00> : vector<8x8xf32>
    %19 = tpu.matmul %14, %16, %cst_16 {dimension_numbers = #tpu.dot_dimension_numbers<[1], [1], [0], [0], [0, 0, 1, 0], [], []>} : vector<8x8xbf16>, vector<8x8xbf16>, vector<8x8xf32> -> vector<8x8xf32>
    %cst_17 = arith.constant dense<0xFF800000> : vector<8xf32>
    %20 = vector.multi_reduction <maximumf>, %19, %cst_17 [1] : vector<8x8xf32> to vector<8xf32>
    %21 = vector.shape_cast %20 : vector<8xf32> to vector<8x1xf32>
    %22 = vector.broadcast %21 : vector<8x1xf32> to vector<8x8xf32>
    %23 = arith.subf %19, %22 : vector<8x8xf32>
    %24 = math.exp %23 : vector<8x8xf32>
    %cst_18 = arith.constant dense<0.000000e+00> : vector<8xf32>
    %25 = vector.multi_reduction <add>, %24, %cst_18 [1] : vector<8x8xf32> to vector<8xf32>
    %26 = vector.shape_cast %25 : vector<8xf32> to vector<8x1xf32>
    %27 = tpu.reciprocal %26 {approx = true} : vector<8x1xf32> -> vector<8x1xf32>
    %28 = arith.mulf %26, %27 : vector<8x1xf32>
    %cst_19 = arith.constant 2.000000e+00 : f32
    %29 = vector.broadcast %cst_19 : f32 to vector<8x1xf32>
    %30 = arith.subf %29, %28 : vector<8x1xf32>
    %31 = arith.mulf %27, %30 : vector<8x1xf32>
    %32 = arith.truncf %24 : vector<8x8xf32> to vector<8x8xbf16>
    %cst_20 = arith.constant dense<0.000000e+00> : vector<8x8xf32>
    %33 = tpu.matmul %32, %18, %cst_20 {dimension_numbers = #tpu.dot_dimension_numbers<[1], [0], [0], [1], [0, 0, 1, 1], [], []>} : vector<8x8xbf16>, vector<8x8xbf16>, vector<8x8xf32> -> vector<8x8xf32>
    %34 = vector.broadcast %31 : vector<8x1xf32> to vector<8x8xf32>
    %35 = arith.mulf %33, %34 : vector<8x8xf32>
    %c0_21 = arith.constant 0 : index
    %c0_22 = arith.constant 0 : index
    %36 = vector.load %arg9[%c0_21, %c0_22] : memref<8x64xf32, #tpu.memory_space<vmem>>, vector<8x8xf32>
    tpu.vector_store %arg9[%c0_21, %c0_22], %35 {strides = array<i32>} : memref<8x64xf32, #tpu.memory_space<vmem>>, vector<8x8xf32>,
    %37 = vector.extract_strided_slice %10 {offsets = [0, 8], sizes = [8, 8], strides = [1, 1]} : vector<8x64xf32> to vector<8x8xf32>
    %38 = arith.truncf %37 : vector<8x8xf32> to vector<8x8xbf16>
    %39 = vector.extract_strided_slice %11 {offsets = [0, 8], sizes = [8, 8], strides = [1, 1]} : vector<8x64xf32> to vector<8x8xf32>
    %40 = arith.truncf %39 : vector<8x8xf32> to vector<8x8xbf16>
    %41 = vector.extract_strided_slice %12 {offsets = [0, 8], sizes = [8, 8], strides = [1, 1]} : vector<8x64xf32> to vector<8x8xf32>
    %42 = arith.truncf %41 : vector<8x8xf32> to vector<8x8xbf16>
    %cst_23 = arith.constant dense<0.000000e+00> : vector<8x8xf32>
    %43 = tpu.matmul %38, %40, %cst_23 {dimension_numbers = #tpu.dot_dimension_numbers<[1], [1], [0], [0], [0, 0, 1, 0], [], []>} : vector<8x8xbf16>, vector<8x8xbf16>, vector<8x8xf32> -> vector<8x8xf32>
    %cst_24 = arith.constant dense<0xFF800000> : vector<8xf32>
    %44 = vector.multi_reduction <maximumf>, %43, %cst_24 [1] : vector<8x8xf32> to vector<8xf32>
    %45 = vector.shape_cast %44 : vector<8xf32> to vector<8x1xf32>
    %46 = vector.broadcast %45 : vector<8x1xf32> to vector<8x8xf32>
    %47 = arith.subf %43, %46 : vector<8x8xf32>
    %48 = math.exp %47 : vector<8x8xf32>
    %cst_25 = arith.constant dense<0.000000e+00> : vector<8xf32>
    %49 = vector.multi_reduction <add>, %48, %cst_25 [1] : vector<8x8xf32> to vector<8xf32>
    %50 = vector.shape_cast %49 : vector<8xf32> to vector<8x1xf32>
    %51 = tpu.reciprocal %50 {approx = true} : vector<8x1xf32> -> vector<8x1xf32>
    %52 = arith.mulf %50, %51 : vector<8x1xf32>
    %cst_26 = arith.constant 2.000000e+00 : f32
    %53 = vector.broadcast %cst_26 : f32 to vector<8x1xf32>
    %54 = arith.subf %53, %52 : vector<8x1xf32>
    %55 = arith.mulf %51, %54 : vector<8x1xf32>
    %56 = arith.truncf %48 : vector<8x8xf32> to vector<8x8xbf16>
    %cst_27 = arith.constant dense<0.000000e+00> : vector<8x8xf32>
    %57 = tpu.matmul %56, %42, %cst_27 {dimension_numbers = #tpu.dot_dimension_numbers<[1], [0], [0], [1], [0, 0, 1, 1], [], []>} : vector<8x8xbf16>, vector<8x8xbf16>, vector<8x8xf32> -> vector<8x8xf32>
    %58 = vector.broadcast %55 : vector<8x1xf32> to vector<8x8xf32>
    %59 = arith.mulf %57, %58 : vector<8x8xf32>
    %c0_28 = arith.constant 0 : index
    %c8 = arith.constant 8 : index
    %60 = vector.load %arg9[%c0_28, %c8] : memref<8x64xf32, #tpu.memory_space<vmem>>, vector<8x8xf32>
    tpu.vector_store %arg9[%c0_28, %c8], %59 {strides = array<i32>} : memref<8x64xf32, #tpu.memory_space<vmem>>, vector<8x8xf32>,
    %61 = vector.extract_strided_slice %10 {offsets = [0, 16], sizes = [8, 8], strides = [1, 1]} : vector<8x64xf32> to vector<8x8xf32>
    %62 = arith.truncf %61 : vector<8x8xf32> to vector<8x8xbf16>
    %63 = vector.extract_strided_slice %11 {offsets = [0, 16], sizes = [8, 8], strides = [1, 1]} : vector<8x64xf32> to vector<8x8xf32>
    %64 = arith.truncf %63 : vector<8x8xf32> to vector<8x8xbf16>
    %65 = vector.extract_strided_slice %12 {offsets = [0, 16], sizes = [8, 8], strides = [1, 1]} : vector<8x64xf32> to vector<8x8xf32>
    %66 = arith.truncf %65 : vector<8x8xf32> to vector<8x8xbf16>
    %cst_29 = arith.constant dense<0.000000e+00> : vector<8x8xf32>
    %67 = tpu.matmul %62, %64, %cst_29 {dimension_numbers = #tpu.dot_dimension_numbers<[1], [1], [0], [0], [0, 0, 1, 0], [], []>} : vector<8x8xbf16>, vector<8x8xbf16>, vector<8x8xf32> -> vector<8x8xf32>
    %cst_30 = arith.constant dense<0xFF800000> : vector<8xf32>
    %68 = vector.multi_reduction <maximumf>, %67, %cst_30 [1] : vector<8x8xf32> to vector<8xf32>
    %69 = vector.shape_cast %68 : vector<8xf32> to vector<8x1xf32>
    %70 = vector.broadcast %69 : vector<8x1xf32> to vector<8x8xf32>
    %71 = arith.subf %67, %70 : vector<8x8xf32>
    %72 = math.exp %71 : vector<8x8xf32>
    %cst_31 = arith.constant dense<0.000000e+00> : vector<8xf32>
    %73 = vector.multi_reduction <add>, %72, %cst_31 [1] : vector<8x8xf32> to vector<8xf32>
    %74 = vector.shape_cast %73 : vector<8xf32> to vector<8x1xf32>
    %75 = tpu.reciprocal %74 {approx = true} : vector<8x1xf32> -> vector<8x1xf32>
    %76 = arith.mulf %74, %75 : vector<8x1xf32>
    %cst_32 = arith.constant 2.000000e+00 : f32
    %77 = vector.broadcast %cst_32 : f32 to vector<8x1xf32>
    %78 = arith.subf %77, %76 : vector<8x1xf32>
    %79 = arith.mulf %75, %78 : vector<8x1xf32>
    %80 = arith.truncf %72 : vector<8x8xf32> to vector<8x8xbf16>
    %cst_33 = arith.constant dense<0.000000e+00> : vector<8x8xf32>
    %81 = tpu.matmul %80, %66, %cst_33 {dimension_numbers = #tpu.dot_dimension_numbers<[1], [0], [0], [1], [0, 0, 1, 1], [], []>} : vector<8x8xbf16>, vector<8x8xbf16>, vector<8x8xf32> -> vector<8x8xf32>
    %82 = vector.broadcast %79 : vector<8x1xf32> to vector<8x8xf32>
    %83 = arith.mulf %81, %82 : vector<8x8xf32>
    %c0_34 = arith.constant 0 : index
    %c16 = arith.constant 16 : index
    %84 = vector.load %arg9[%c0_34, %c16] : memref<8x64xf32, #tpu.memory_space<vmem>>, vector<8x8xf32>
    tpu.vector_store %arg9[%c0_34, %c16], %83 {strides = array<i32>} : memref<8x64xf32, #tpu.memory_space<vmem>>, vector<8x8xf32>,
    %85 = vector.extract_strided_slice %10 {offsets = [0, 24], sizes = [8, 8], strides = [1, 1]} : vector<8x64xf32> to vector<8x8xf32>
    %86 = arith.truncf %85 : vector<8x8xf32> to vector<8x8xbf16>
    %87 = vector.extract_strided_slice %11 {offsets = [0, 24], sizes = [8, 8], strides = [1, 1]} : vector<8x64xf32> to vector<8x8xf32>
    %88 = arith.truncf %87 : vector<8x8xf32> to vector<8x8xbf16>
    %89 = vector.extract_strided_slice %12 {offsets = [0, 24], sizes = [8, 8], strides = [1, 1]} : vector<8x64xf32> to vector<8x8xf32>
    %90 = arith.truncf %89 : vector<8x8xf32> to vector<8x8xbf16>
    %cst_35 = arith.constant dense<0.000000e+00> : vector<8x8xf32>
    %91 = tpu.matmul %86, %88, %cst_35 {dimension_numbers = #tpu.dot_dimension_numbers<[1], [1], [0], [0], [0, 0, 1, 0], [], []>} : vector<8x8xbf16>, vector<8x8xbf16>, vector<8x8xf32> -> vector<8x8xf32>
    %cst_36 = arith.constant dense<0xFF800000> : vector<8xf32>
    %92 = vector.multi_reduction <maximumf>, %91, %cst_36 [1] : vector<8x8xf32> to vector<8xf32>
    %93 = vector.shape_cast %92 : vector<8xf32> to vector<8x1xf32>
    %94 = vector.broadcast %93 : vector<8x1xf32> to vector<8x8xf32>
    %95 = arith.subf %91, %94 : vector<8x8xf32>
    %96 = math.exp %95 : vector<8x8xf32>
    %cst_37 = arith.constant dense<0.000000e+00> : vector<8xf32>
    %97 = vector.multi_reduction <add>, %96, %cst_37 [1] : vector<8x8xf32> to vector<8xf32>
    %98 = vector.shape_cast %97 : vector<8xf32> to vector<8x1xf32>
    %99 = tpu.reciprocal %98 {approx = true} : vector<8x1xf32> -> vector<8x1xf32>
    %100 = arith.mulf %98, %99 : vector<8x1xf32>
    %cst_38 = arith.constant 2.000000e+00 : f32
    %101 = vector.broadcast %cst_38 : f32 to vector<8x1xf32>
    %102 = arith.subf %101, %100 : vector<8x1xf32>
    %103 = arith.mulf %99, %102 : vector<8x1xf32>
    %104 = arith.truncf %96 : vector<8x8xf32> to vector<8x8xbf16>
    %cst_39 = arith.constant dense<0.000000e+00> : vector<8x8xf32>
    %105 = tpu.matmul %104, %90, %cst_39 {dimension_numbers = #tpu.dot_dimension_numbers<[1], [0], [0], [1], [0, 0, 1, 1], [], []>} : vector<8x8xbf16>, vector<8x8xbf16>, vector<8x8xf32> -> vector<8x8xf32>
    %106 = vector.broadcast %103 : vector<8x1xf32> to vector<8x8xf32>
    %107 = arith.mulf %105, %106 : vector<8x8xf32>
    %c0_40 = arith.constant 0 : index
    %c24 = arith.constant 24 : index
    %108 = vector.load %arg9[%c0_40, %c24] : memref<8x64xf32, #tpu.memory_space<vmem>>, vector<8x8xf32>
    tpu.vector_store %arg9[%c0_40, %c24], %107 {strides = array<i32>} : memref<8x64xf32, #tpu.memory_space<vmem>>, vector<8x8xf32>,
    %109 = vector.extract_strided_slice %10 {offsets = [0, 32], sizes = [8, 8], strides = [1, 1]} : vector<8x64xf32> to vector<8x8xf32>
    %110 = arith.truncf %109 : vector<8x8xf32> to vector<8x8xbf16>
    %111 = vector.extract_strided_slice %11 {offsets = [0, 32], sizes = [8, 8], strides = [1, 1]} : vector<8x64xf32> to vector<8x8xf32>
    %112 = arith.truncf %111 : vector<8x8xf32> to vector<8x8xbf16>
    %113 = vector.extract_strided_slice %12 {offsets = [0, 32], sizes = [8, 8], strides = [1, 1]} : vector<8x64xf32> to vector<8x8xf32>
    %114 = arith.truncf %113 : vector<8x8xf32> to vector<8x8xbf16>
    %cst_41 = arith.constant dense<0.000000e+00> : vector<8x8xf32>
    %115 = tpu.matmul %110, %112, %cst_41 {dimension_numbers = #tpu.dot_dimension_numbers<[1], [1], [0], [0], [0, 0, 1, 0], [], []>} : vector<8x8xbf16>, vector<8x8xbf16>, vector<8x8xf32> -> vector<8x8xf32>
    %cst_42 = arith.constant dense<0xFF800000> : vector<8xf32>
    %116 = vector.multi_reduction <maximumf>, %115, %cst_42 [1] : vector<8x8xf32> to vector<8xf32>
    %117 = vector.shape_cast %116 : vector<8xf32> to vector<8x1xf32>
    %118 = vector.broadcast %117 : vector<8x1xf32> to vector<8x8xf32>
    %119 = arith.subf %115, %118 : vector<8x8xf32>
    %120 = math.exp %119 : vector<8x8xf32>
    %cst_43 = arith.constant dense<0.000000e+00> : vector<8xf32>
    %121 = vector.multi_reduction <add>, %120, %cst_43 [1] : vector<8x8xf32> to vector<8xf32>
    %122 = vector.shape_cast %121 : vector<8xf32> to vector<8x1xf32>
    %123 = tpu.reciprocal %122 {approx = true} : vector<8x1xf32> -> vector<8x1xf32>
    %124 = arith.mulf %122, %123 : vector<8x1xf32>
    %cst_44 = arith.constant 2.000000e+00 : f32
    %125 = vector.broadcast %cst_44 : f32 to vector<8x1xf32>
    %126 = arith.subf %125, %124 : vector<8x1xf32>
    %127 = arith.mulf %123, %126 : vector<8x1xf32>
    %128 = arith.truncf %120 : vector<8x8xf32> to vector<8x8xbf16>
    %cst_45 = arith.constant dense<0.000000e+00> : vector<8x8xf32>
    %129 = tpu.matmul %128, %114, %cst_45 {dimension_numbers = #tpu.dot_dimension_numbers<[1], [0], [0], [1], [0, 0, 1, 1], [], []>} : vector<8x8xbf16>, vector<8x8xbf16>, vector<8x8xf32> -> vector<8x8xf32>
    %130 = vector.broadcast %127 : vector<8x1xf32> to vector<8x8xf32>
    %131 = arith.mulf %129, %130 : vector<8x8xf32>
    %c0_46 = arith.constant 0 : index
    %c32 = arith.constant 32 : index
    %132 = vector.load %arg9[%c0_46, %c32] : memref<8x64xf32, #tpu.memory_space<vmem>>, vector<8x8xf32>
    tpu.vector_store %arg9[%c0_46, %c32], %131 {strides = array<i32>} : memref<8x64xf32, #tpu.memory_space<vmem>>, vector<8x8xf32>,
    %133 = vector.extract_strided_slice %10 {offsets = [0, 40], sizes = [8, 8], strides = [1, 1]} : vector<8x64xf32> to vector<8x8xf32>
    %134 = arith.truncf %133 : vector<8x8xf32> to vector<8x8xbf16>
    %135 = vector.extract_strided_slice %11 {offsets = [0, 40], sizes = [8, 8], strides = [1, 1]} : vector<8x64xf32> to vector<8x8xf32>
    %136 = arith.truncf %135 : vector<8x8xf32> to vector<8x8xbf16>
    %137 = vector.extract_strided_slice %12 {offsets = [0, 40], sizes = [8, 8], strides = [1, 1]} : vector<8x64xf32> to vector<8x8xf32>
    %138 = arith.truncf %137 : vector<8x8xf32> to vector<8x8xbf16>
    %cst_47 = arith.constant dense<0.000000e+00> : vector<8x8xf32>
    %139 = tpu.matmul %134, %136, %cst_47 {dimension_numbers = #tpu.dot_dimension_numbers<[1], [1], [0], [0], [0, 0, 1, 0], [], []>} : vector<8x8xbf16>, vector<8x8xbf16>, vector<8x8xf32> -> vector<8x8xf32>
    %cst_48 = arith.constant dense<0xFF800000> : vector<8xf32>
    %140 = vector.multi_reduction <maximumf>, %139, %cst_48 [1] : vector<8x8xf32> to vector<8xf32>
    %141 = vector.shape_cast %140 : vector<8xf32> to vector<8x1xf32>
    %142 = vector.broadcast %141 : vector<8x1xf32> to vector<8x8xf32>
    %143 = arith.subf %139, %142 : vector<8x8xf32>
    %144 = math.exp %143 : vector<8x8xf32>
    %cst_49 = arith.constant dense<0.000000e+00> : vector<8xf32>
    %145 = vector.multi_reduction <add>, %144, %cst_49 [1] : vector<8x8xf32> to vector<8xf32>
    %146 = vector.shape_cast %145 : vector<8xf32> to vector<8x1xf32>
    %147 = tpu.reciprocal %146 {approx = true} : vector<8x1xf32> -> vector<8x1xf32>
    %148 = arith.mulf %146, %147 : vector<8x1xf32>
    %cst_50 = arith.constant 2.000000e+00 : f32
    %149 = vector.broadcast %cst_50 : f32 to vector<8x1xf32>
    %150 = arith.subf %149, %148 : vector<8x1xf32>
    %151 = arith.mulf %147, %150 : vector<8x1xf32>
    %152 = arith.truncf %144 : vector<8x8xf32> to vector<8x8xbf16>
    %cst_51 = arith.constant dense<0.000000e+00> : vector<8x8xf32>
    %153 = tpu.matmul %152, %138, %cst_51 {dimension_numbers = #tpu.dot_dimension_numbers<[1], [0], [0], [1], [0, 0, 1, 1], [], []>} : vector<8x8xbf16>, vector<8x8xbf16>, vector<8x8xf32> -> vector<8x8xf32>
    %154 = vector.broadcast %151 : vector<8x1xf32> to vector<8x8xf32>
    %155 = arith.mulf %153, %154 : vector<8x8xf32>
    %c0_52 = arith.constant 0 : index
    %c40 = arith.constant 40 : index
    %156 = vector.load %arg9[%c0_52, %c40] : memref<8x64xf32, #tpu.memory_space<vmem>>, vector<8x8xf32>
    tpu.vector_store %arg9[%c0_52, %c40], %155 {strides = array<i32>} : memref<8x64xf32, #tpu.memory_space<vmem>>, vector<8x8xf32>,
    %157 = vector.extract_strided_slice %10 {offsets = [0, 48], sizes = [8, 8], strides = [1, 1]} : vector<8x64xf32> to vector<8x8xf32>
    %158 = arith.truncf %157 : vector<8x8xf32> to vector<8x8xbf16>
    %159 = vector.extract_strided_slice %11 {offsets = [0, 48], sizes = [8, 8], strides = [1, 1]} : vector<8x64xf32> to vector<8x8xf32>
    %160 = arith.truncf %159 : vector<8x8xf32> to vector<8x8xbf16>
    %161 = vector.extract_strided_slice %12 {offsets = [0, 48], sizes = [8, 8], strides = [1, 1]} : vector<8x64xf32> to vector<8x8xf32>
    %162 = arith.truncf %161 : vector<8x8xf32> to vector<8x8xbf16>
    %cst_53 = arith.constant dense<0.000000e+00> : vector<8x8xf32>
    %163 = tpu.matmul %158, %160, %cst_53 {dimension_numbers = #tpu.dot_dimension_numbers<[1], [1], [0], [0], [0, 0, 1, 0], [], []>} : vector<8x8xbf16>, vector<8x8xbf16>, vector<8x8xf32> -> vector<8x8xf32>
    %cst_54 = arith.constant dense<0xFF800000> : vector<8xf32>
    %164 = vector.multi_reduction <maximumf>, %163, %cst_54 [1] : vector<8x8xf32> to vector<8xf32>
    %165 = vector.shape_cast %164 : vector<8xf32> to vector<8x1xf32>
    %166 = vector.broadcast %165 : vector<8x1xf32> to vector<8x8xf32>
    %167 = arith.subf %163, %166 : vector<8x8xf32>
    %168 = math.exp %167 : vector<8x8xf32>
    %cst_55 = arith.constant dense<0.000000e+00> : vector<8xf32>
    %169 = vector.multi_reduction <add>, %168, %cst_55 [1] : vector<8x8xf32> to vector<8xf32>
    %170 = vector.shape_cast %169 : vector<8xf32> to vector<8x1xf32>
    %171 = tpu.reciprocal %170 {approx = true} : vector<8x1xf32> -> vector<8x1xf32>
    %172 = arith.mulf %170, %171 : vector<8x1xf32>
    %cst_56 = arith.constant 2.000000e+00 : f32
    %173 = vector.broadcast %cst_56 : f32 to vector<8x1xf32>
    %174 = arith.subf %173, %172 : vector<8x1xf32>
    %175 = arith.mulf %171, %174 : vector<8x1xf32>
    %176 = arith.truncf %168 : vector<8x8xf32> to vector<8x8xbf16>
    %cst_57 = arith.constant dense<0.000000e+00> : vector<8x8xf32>
    %177 = tpu.matmul %176, %162, %cst_57 {dimension_numbers = #tpu.dot_dimension_numbers<[1], [0], [0], [1], [0, 0, 1, 1], [], []>} : vector<8x8xbf16>, vector<8x8xbf16>, vector<8x8xf32> -> vector<8x8xf32>
    %178 = vector.broadcast %175 : vector<8x1xf32> to vector<8x8xf32>
    %179 = arith.mulf %177, %178 : vector<8x8xf32>
    %c0_58 = arith.constant 0 : index
    %c48 = arith.constant 48 : index
    %180 = vector.load %arg9[%c0_58, %c48] : memref<8x64xf32, #tpu.memory_space<vmem>>, vector<8x8xf32>
    tpu.vector_store %arg9[%c0_58, %c48], %179 {strides = array<i32>} : memref<8x64xf32, #tpu.memory_space<vmem>>, vector<8x8xf32>,
    %181 = vector.extract_strided_slice %10 {offsets = [0, 56], sizes = [8, 8], strides = [1, 1]} : vector<8x64xf32> to vector<8x8xf32>
    %182 = arith.truncf %181 : vector<8x8xf32> to vector<8x8xbf16>
    %183 = vector.extract_strided_slice %11 {offsets = [0, 56], sizes = [8, 8], strides = [1, 1]} : vector<8x64xf32> to vector<8x8xf32>
    %184 = arith.truncf %183 : vector<8x8xf32> to vector<8x8xbf16>
    %185 = vector.extract_strided_slice %12 {offsets = [0, 56], sizes = [8, 8], strides = [1, 1]} : vector<8x64xf32> to vector<8x8xf32>
    %186 = arith.truncf %185 : vector<8x8xf32> to vector<8x8xbf16>
    %cst_59 = arith.constant dense<0.000000e+00> : vector<8x8xf32>
    %187 = tpu.matmul %182, %184, %cst_59 {dimension_numbers = #tpu.dot_dimension_numbers<[1], [1], [0], [0], [0, 0, 1, 0], [], []>} : vector<8x8xbf16>, vector<8x8xbf16>, vector<8x8xf32> -> vector<8x8xf32>
    %cst_60 = arith.constant dense<0xFF800000> : vector<8xf32>
    %188 = vector.multi_reduction <maximumf>, %187, %cst_60 [1] : vector<8x8xf32> to vector<8xf32>
    %189 = vector.shape_cast %188 : vector<8xf32> to vector<8x1xf32>
    %190 = vector.broadcast %189 : vector<8x1xf32> to vector<8x8xf32>
    %191 = arith.subf %187, %190 : vector<8x8xf32>
    %192 = math.exp %191 : vector<8x8xf32>
    %cst_61 = arith.constant dense<0.000000e+00> : vector<8xf32>
    %193 = vector.multi_reduction <add>, %192, %cst_61 [1] : vector<8x8xf32> to vector<8xf32>
    %194 = vector.shape_cast %193 : vector<8xf32> to vector<8x1xf32>
    %195 = tpu.reciprocal %194 {approx = true} : vector<8x1xf32> -> vector<8x1xf32>
    %196 = arith.mulf %194, %195 : vector<8x1xf32>
    %cst_62 = arith.constant 2.000000e+00 : f32
    %197 = vector.broadcast %cst_62 : f32 to vector<8x1xf32>
    %198 = arith.subf %197, %196 : vector<8x1xf32>
    %199 = arith.mulf %195, %198 : vector<8x1xf32>
    %200 = arith.truncf %192 : vector<8x8xf32> to vector<8x8xbf16>
    %cst_63 = arith.constant dense<0.000000e+00> : vector<8x8xf32>
    %201 = tpu.matmul %200, %186, %cst_63 {dimension_numbers = #tpu.dot_dimension_numbers<[1], [0], [0], [1], [0, 0, 1, 1], [], []>} : vector<8x8xbf16>, vector<8x8xbf16>, vector<8x8xf32> -> vector<8x8xf32>
    %202 = vector.broadcast %199 : vector<8x1xf32> to vector<8x8xf32>
    %203 = arith.mulf %201, %202 : vector<8x8xf32>
    %c0_64 = arith.constant 0 : index
    %c56 = arith.constant 56 : index
    %204 = vector.load %arg9[%c0_64, %c56] : memref<8x64xf32, #tpu.memory_space<vmem>>, vector<8x8xf32>
    tpu.vector_store %arg9[%c0_64, %c56], %203 {strides = array<i32>} : memref<8x64xf32, #tpu.memory_space<vmem>>, vector<8x8xf32>,
    %c0_65 = arith.constant 0 : index
    %c0_66 = arith.constant 0 : index
    %205 = vector.load %arg9[%c0_65, %c0_66] : memref<8x64xf32, #tpu.memory_space<vmem>>, vector<8x64xf32>
    %206 = arith.truncf %205 : vector<8x64xf32> to vector<8x64xbf16>
    %cst_67 = arith.constant dense<0.000000e+00> : vector<8x64xf32>
    %207 = tpu.matmul %206, %9, %cst_67 {dimension_numbers = #tpu.dot_dimension_numbers<[1], [0], [0], [1], [0, 0, 1, 1], [], []>} : vector<8x64xbf16>, vector<64x64xbf16>, vector<8x64xf32> -> vector<8x64xf32>
    %c0_68 = arith.constant 0 : index
    %c0_69 = arith.constant 0 : index
    %208 = vector.load %arg7[%c0_68, %c0_69] : memref<1x64xf32, #tpu.memory_space<vmem>>, vector<1x64xf32>
    %209 = vector.broadcast %208 : vector<1x64xf32> to vector<8x64xf32>
    %210 = arith.addf %207, %209 : vector<8x64xf32>
    %c0_70 = arith.constant 0 : index
    %c0_71 = arith.constant 0 : index
    %c0_72 = arith.constant 0 : index
    %211 = vector.load %arg8[%c0_70, %c0_71, %c0_72] : memref<1x8x64xf32, #tpu.memory_space<vmem>>, vector<1x8x64xf32>
    %212 = vector.shape_cast %211 : vector<1x8x64xf32> to vector<8x64xf32>
    %213 = vector.shape_cast %210 : vector<8x64xf32> to vector<1x8x64xf32>
    tpu.vector_store %arg8[%c0_70, %c0_71, %c0_72], %213 {strides = array<i32>} : memref<1x8x64xf32, #tpu.memory_space<vmem>>, vector<1x8x64xf32>,
    return
  }
  func.func @transform_0(%arg0: i32, %arg1: i32) -> (i32, i32, i32) {
    %c0_i32 = arith.constant 0 : i32
    %c0_i32_0 = arith.constant 0 : i32
    %c0_i32_1 = arith.constant 0 : i32
    return %arg0, %c0_i32, %c0_i32_0 : i32, i32, i32
  }
  func.func @transform_1(%arg0: i32, %arg1: i32) -> (i32, i32, i32) {
    %c0_i32 = arith.constant 0 : i32
    %c0_i32_0 = arith.constant 0 : i32
    %c0_i32_1 = arith.constant 0 : i32
    return %arg1, %c0_i32, %c0_i32_0 : i32, i32, i32
  }
  func.func @transform_2(%arg0: i32, %arg1: i32) -> (i32, i32, i32) {
    %c0_i32 = arith.constant 0 : i32
    %c0_i32_0 = arith.constant 0 : i32
    %c0_i32_1 = arith.constant 0 : i32
    return %arg1, %c0_i32, %c0_i32_0 : i32, i32, i32
  }
  func.func @transform_3(%arg0: i32, %arg1: i32) -> (i32, i32, i32) {
    %c0_i32 = arith.constant 0 : i32
    %c0_i32_0 = arith.constant 0 : i32
    %c0_i32_1 = arith.constant 0 : i32
    return %arg1, %c0_i32, %c0_i32_0 : i32, i32, i32
  }
  func.func @transform_4(%arg0: i32, %arg1: i32) -> (i32, i32, i32) {
    %c0_i32 = arith.constant 0 : i32
    %c0_i32_0 = arith.constant 0 : i32
    %c0_i32_1 = arith.constant 0 : i32
    return %arg1, %c0_i32, %c0_i32_0 : i32, i32, i32
  }
  func.func @transform_5(%arg0: i32, %arg1: i32) -> (i32, i32) {
    %c0_i32 = arith.constant 0 : i32
    %c0_i32_0 = arith.constant 0 : i32
    %c0_i32_1 = arith.constant 0 : i32
    return %c0_i32, %c0_i32_0 : i32, i32
  }
  func.func @transform_6(%arg0: i32, %arg1: i32) -> (i32, i32, i32) {
    %c0_i32 = arith.constant 0 : i32
    %c0_i32_0 = arith.constant 0 : i32
    %c0_i32_1 = arith.constant 0 : i32
    return %arg0, %c0_i32, %c0_i32_0 : i32, i32, i32
  }
}

</mosaic_0001>

<llo_original>
// kernel: tpu_custom_call.1
$region0: #{tpu_custom_call.1}
  #allocation0 [shape = 'u32[]', space=smem, size = 0x4, offset = 0x4, fixed_abs, tag = 'smem constant byte address 0x4 - core index']
  #allocation1 [shape = 'u32[144,128]{1,0:T(1,128)}', space=vmem, size = 0x12000, scoped, tag = 'internal scratch']
  #allocation2 [shape = 'f32[8,64]{1,0:T(8,128)}', space=vmem, size = 0x1000, scoped, tag = 'scratch operand']
  %s0 = inlined_call_operand.hbm [shape: bf16[2,8,64], index: 0, kind: input, shape index: {}]
  %s1 = inlined_call_operand.hbm [shape: bf16[1,64,64], index: 1, kind: input, shape index: {}]
  %s2 = inlined_call_operand.hbm [shape: bf16[1,64,64], index: 2, kind: input, shape index: {}]
  %s3 = inlined_call_operand.hbm [shape: bf16[1,64,64], index: 3, kind: input, shape index: {}]
  %s4 = inlined_call_operand.hbm [shape: bf16[1,64,64], index: 4, kind: input, shape index: {}]
  %s5 = inlined_call_operand.vmem [shape: f32[1,64], index: 5, kind: input, shape index: {}]
  %s6 = inlined_call_operand.hbm [shape: f32[2,8,64], index: 6, kind: output, shape index: {}]
  %s7 = sld [smem:[#allocation0]]
  $region77: #{tpu_custom_call.1} parent=0
    _
  %s9 = ssub.s32 1, %s7
  %s10 = scalar_select 0, %s9, %s7
  $region1: #{tpu_custom_call.1} parent=0
    #allocation3 [shape = 'u8[4096]{0}', space=vmem, size = 0x1000, scoped, tag = 'input window, operand 0']
    #allocation4 [shape = 's32[2]{0}', space=sflag, size = 0x8, scoped, tag = 'scoped memory for tpu_custom_call.1']
    #allocation5 [shape = 's32[2]{0}', space=sflag, size = 0x8, scoped, tag = 'scoped memory for tpu_custom_call.1']
    #allocation6 [shape = 'u8[16384]{0}', space=vmem, size = 0x4000, scoped, tag = 'input window, operand 1, single buffered']
    #allocation7 [shape = 's32[1]{0}', space=sflag, size = 0x4, scoped, tag = 'scoped memory for tpu_custom_call.1']
    #allocation8 [shape = 'u8[16384]{0}', space=vmem, size = 0x4000, scoped, tag = 'input window, operand 2, single buffered']
    #allocation9 [shape = 'u8[16384]{0}', space=vmem, size = 0x4000, scoped, tag = 'input window, operand 3, single buffered']
    #allocation10 [shape = 's32[1]{0}', space=sflag, size = 0x4, scoped, tag = 'scoped memory for tpu_custom_call.1']
    #allocation11 [shape = 'u8[16384]{0}', space=vmem, size = 0x4000, scoped, tag = 'input window, operand 4, single buffered']
    #allocation12 [shape = 'u8[8192]{0}', space=vmem, size = 0x2000, scoped, tag = 'output window, operand 0']
    %11 = vsyncpa [#allocation4], 0
    %s12 = scalar_lea.sflag [#allocation4], 1
    %13 = vsyncpa %s12, 0
    %14 = vsyncpa [#allocation7], 0
    %15 = vsyncpa [#allocation10], 0
    %16 = vsyncpa [#allocation5], 0
    %s17 = scalar_lea.sflag [#allocation5], 1
    %18 = vsyncpa %s17, 0
    loop: start=0, step=1, limit=4
    $region2: #{tpu_custom_call.1} parent=1 // loop_pre_header
      _
    $region3: #{tpu_custom_call.1} parent=1 // loop_header
      %s20 = sphi 0, %s24
      %p21 = scmp.ge.s32.totalorder %s20, 4
      %s27 = sphi 0, %s39
      %s28 = sphi 0, %s35
      %s29 = sphi 0, %s27
      %s30 = sphi 0, %s28
      %s31 = sphi 0, %s29
      %s32 = sphi 0, %s30
      %s42 = sphi 0, %s44
      %s45 = sphi 0, %s42
      %s46 = sphi 0, %s45
      %s62 = sphi 0, %s46
      %s68 = sphi 0, %s70
      %s71 = sphi 0, %s68
      %s72 = sphi 0, %s71
      %s88 = sphi 0, %s72
      %s94 = sphi 0, %s96
      %s97 = sphi 0, %s94
      %s98 = sphi 0, %s97
      %s114 = sphi 0, %s98
      %s120 = sphi 0, %s122
      %s123 = sphi 0, %s120
      %s124 = sphi 0, %s123
      %s140 = sphi 0, %s124
      %s146 = sphi 0, %s148
      %s149 = sphi 0, %s146
      %s150 = sphi 0, %s149
      %s166 = sphi 0, %s150
      %s170 = sphi 0, %s170
      %s172 = sphi 0, %s170
      %s173 = sphi 0, %s172
      %s187 = sphi 0, %s173
      %s193 = sphi 0, %s195
      %s196 = sphi 0, %s193
      %s197 = sphi 0, %s196
      %s213 = sphi 0, %s197
    $region4: #{tpu_custom_call.1} parent=1 // loop_header_branch
      %23 = sbr.rel (%p21) target = $region8
    $region5: #{tpu_custom_call.1} parent=1 // loop_body
      %s25 = ssub.s32 %s20, 1
      %s26 = ssub.s32 %s20, 2
      %s33 = sadd.s32 1, %s28
      %p34 = scmp.ge.s32.totalorder %s33, 1
      %s35 = scalar_select %p34, 0, %s33
      %s36 = sadd.s32 1, %s27
      %s37 = scalar_select %p34, %s36, %s27
      %p38 = scmp.ge.s32.totalorder %s37, 2
      %s39 = scalar_select %p38, 0, %s37
      %s40 = ssub.s32 %s27, %s39
      %p41 = scmp.eq.s32.totalorder %s40, 0
      %s43 = sadd.s32 %s42, 1
      %s44 = scalar_select %p41, %s42, %s43
      %p47 = pneg %p41
      %p48 = scmp.eq.s32.totalorder %s20, 1
      %p49 = por %p47, %p48
      %p50 = scmp.ne.s32.totalorder %s42, %s45
      %p51 = scmp.eq.s32.totalorder %s20, 0
      %p52 = por %p50, %p51
      %p53 = scmp.ne.s32.totalorder %s42, %s45
      %p54 = scmp.eq.s32.totalorder %s25, 1
      %p55 = por %p53, %p54
      %p56 = scmp.ne.s32.totalorder %s45, %s46
      %p57 = scmp.eq.s32.totalorder %s25, 0
      %p58 = por %p56, %p57
      %p59 = scmp.ne.s32.totalorder %s45, %s46
      %p60 = scmp.eq.s32.totalorder %s26, 1
      %p61 = por %p59, %p60
      %p63 = scmp.ne.s32.totalorder %s46, %s62
      %p64 = scmp.eq.s32.totalorder %s26, 0
      %p65 = por %p63, %p64
      %s66 = ssub.s32 %s28, %s35
      %p67 = scmp.eq.s32.totalorder %s66, 0
      %s69 = sadd.s32 %s68, 1
      %s70 = scalar_select %p67, %s68, %s69
      %p73 = pneg %p67
      %p74 = scmp.eq.s32.totalorder %s20, 1
      %p75 = por %p73, %p74
      %p76 = scmp.ne.s32.totalorder %s68, %s71
      %p77 = scmp.eq.s32.totalorder %s20, 0
      %p78 = por %p76, %p77
      %p79 = scmp.ne.s32.totalorder %s68, %s71
      %p80 = scmp.eq.s32.totalorder %s25, 1
      %p81 = por %p79, %p80
      %p82 = scmp.ne.s32.totalorder %s71, %s72
      %p83 = scmp.eq.s32.totalorder %s25, 0
      %p84 = por %p82, %p83
      %p85 = scmp.ne.s32.totalorder %s71, %s72
      %p86 = scmp.eq.s32.totalorder %s26, 1
      %p87 = por %p85, %p86
      %p89 = scmp.ne.s32.totalorder %s72, %s88
      %p90 = scmp.eq.s32.totalorder %s26, 0
      %p91 = por %p89, %p90
      %s92 = ssub.s32 %s28, %s35
      %p93 = scmp.eq.s32.totalorder %s92, 0
      %s95 = sadd.s32 %s94, 1
      %s96 = scalar_select %p93, %s94, %s95
      %p99 = pneg %p93
      %p100 = scmp.eq.s32.totalorder %s20, 1
      %p101 = por %p99, %p100
      %p102 = scmp.ne.s32.totalorder %s94, %s97
      %p103 = scmp.eq.s32.totalorder %s20, 0
      %p104 = por %p102, %p103
      %p105 = scmp.ne.s32.totalorder %s94, %s97
      %p106 = scmp.eq.s32.totalorder %s25, 1
      %p107 = por %p105, %p106
      %p108 = scmp.ne.s32.totalorder %s97, %s98
      %p109 = scmp.eq.s32.totalorder %s25, 0
      %p110 = por %p108, %p109
      %p111 = scmp.ne.s32.totalorder %s97, %s98
      %p112 = scmp.eq.s32.totalorder %s26, 1
      %p113 = por %p111, %p112
      %p115 = scmp.ne.s32.totalorder %s98, %s114
      %p116 = scmp.eq.s32.totalorder %s26, 0
      %p117 = por %p115, %p116
      %s118 = ssub.s32 %s28, %s35
      %p119 = scmp.eq.s32.totalorder %s118, 0
      %s121 = sadd.s32 %s120, 1
      %s122 = scalar_select %p119, %s120, %s121
      %p125 = pneg %p119
      %p126 = scmp.eq.s32.totalorder %s20, 1
      %p127 = por %p125, %p126
      %p128 = scmp.ne.s32.totalorder %s120, %s123
      %p129 = scmp.eq.s32.totalorder %s20, 0
      %p130 = por %p128, %p129
      %p131 = scmp.ne.s32.totalorder %s120, %s123
      %p132 = scmp.eq.s32.totalorder %s25, 1
      %p133 = por %p131, %p132
      %p134 = scmp.ne.s32.totalorder %s123, %s124
      %p135 = scmp.eq.s32.totalorder %s25, 0
      %p136 = por %p134, %p135
      %p137 = scmp.ne.s32.totalorder %s123, %s124
      %p138 = scmp.eq.s32.totalorder %s26, 1
      %p139 = por %p137, %p138
      %p141 = scmp.ne.s32.totalorder %s124, %s140
      %p142 = scmp.eq.s32.totalorder %s26, 0
      %p143 = por %p141, %p142
      %s144 = ssub.s32 %s28, %s35
      %p145 = scmp.eq.s32.totalorder %s144, 0
      %s147 = sadd.s32 %s146, 1
      %s148 = scalar_select %p145, %s146, %s147
      %p151 = pneg %p145
      %p152 = scmp.eq.s32.totalorder %s20, 1
      %p153 = por %p151, %p152
      %p154 = scmp.ne.s32.totalorder %s146, %s149
      %p155 = scmp.eq.s32.totalorder %s20, 0
      %p156 = por %p154, %p155
      %p157 = scmp.ne.s32.totalorder %s146, %s149
      %p158 = scmp.eq.s32.totalorder %s25, 1
      %p159 = por %p157, %p158
      %p160 = scmp.ne.s32.totalorder %s149, %s150
      %p161 = scmp.eq.s32.totalorder %s25, 0
      %p162 = por %p160, %p161
      %p163 = scmp.ne.s32.totalorder %s149, %s150
      %p164 = scmp.eq.s32.totalorder %s26, 1
      %p165 = por %p163, %p164
      %p167 = scmp.ne.s32.totalorder %s150, %s166
      %p168 = scmp.eq.s32.totalorder %s26, 0
      %p169 = por %p167, %p168
      %s171 = sadd.s32 %s170, 1
      %p174 = scmp.eq.s32.totalorder %s20, 1
      %p175 = scmp.ne.s32.totalorder %s170, %s172
      %p176 = scmp.eq.s32.totalorder %s20, 0
      %p177 = por %p175, %p176
      %p178 = scmp.ne.s32.totalorder %s170, %s172
      %p179 = scmp.eq.s32.totalorder %s25, 1
      %p180 = por %p178, %p179
      %p181 = scmp.ne.s32.totalorder %s172, %s173
      %p182 = scmp.eq.s32.totalorder %s25, 0
      %p183 = por %p181, %p182
      %p184 = scmp.ne.s32.totalorder %s172, %s173
      %p185 = scmp.eq.s32.totalorder %s26, 1
      %p186 = por %p184, %p185
      %p188 = scmp.ne.s32.totalorder %s173, %s187
      %p189 = scmp.eq.s32.totalorder %s26, 0
      %p190 = por %p188, %p189
      %s191 = ssub.s32 %s27, %s39
      %p192 = scmp.eq.s32.totalorder %s191, 0
      %s194 = sadd.s32 %s193, 1
      %s195 = scalar_select %p192, %s193, %s194
      %p198 = pneg %p192
      %p199 = scmp.eq.s32.totalorder %s20, 1
      %p200 = por %p198, %p199
      %p201 = scmp.ne.s32.totalorder %s193, %s196
      %p202 = scmp.eq.s32.totalorder %s20, 0
      %p203 = por %p201, %p202
      %p204 = scmp.ne.s32.totalorder %s193, %s196
      %p205 = scmp.eq.s32.totalorder %s25, 1
      %p206 = por %p204, %p205
      %p207 = scmp.ne.s32.totalorder %s196, %s197
      %p208 = scmp.eq.s32.totalorder %s25, 0
      %p209 = por %p207, %p208
      %p210 = scmp.ne.s32.totalorder %s196, %s197
      %p211 = scmp.eq.s32.totalorder %s26, 1
      %p212 = por %p210, %p211
      %p214 = scmp.ne.s32.totalorder %s197, %s213
      %p215 = scmp.eq.s32.totalorder %s26, 0
      %p216 = por %p214, %p215
      %p217 = scmp.le.s32.totalorder 1, %s20
      %p218 = scmp.lt.s32.totalorder %s20, 3
      %p219 = pnand %p217, %p218
      %p220 = pneg %p219
      // Predicated region
      $region9: #{tpu_custom_call.1} parent=5 // pred_check
        _
      $region10: #{tpu_custom_call.1} parent=5 // pred_check_branch
        %222 = sbr.rel (%p219) target = $region12
      $region11: #{tpu_custom_call.1} parent=5 // pred_region
        %s223 = ssub.s32 %s20, 1
        // Predicated region
        $region13: #{tpu_custom_call.1} parent=11 // pred_check
          %p224 = pneg %p84
        $region14: #{tpu_custom_call.1} parent=11 // pred_check_branch
          %226 = sbr.rel (%p224) target = $region16
        $region15: #{tpu_custom_call.1} parent=11 // pred_region
          %s228 = ssub.s32 512, 512
          %229 = vsyncadd [#allocation7], %s228
          %s230 = smul.addr %s30, 8
          %s231 = smul.addr %s230, 64
          %s232 = scalar_lea.hbm %s1, %s231
          %s233 = sshll.u32 [#allocation6], 4
          %s234 = int_to_ptr.vmem [resolvable:$true] %s233
          %239 = dma.hbm_to_vmem [thread:$0]  %s232, 512, %s234, [#allocation7], 64, 64, 4
        $region16: #{tpu_custom_call.1} parent=11 // pred_fallthru
          _
        // Predicated region
        $region17: #{tpu_custom_call.1} parent=11 // pred_check
          %p240 = pneg %p110
        $region18: #{tpu_custom_call.1} parent=11 // pred_check_branch
          %242 = sbr.rel (%p240) target = $region20
        $region19: #{tpu_custom_call.1} parent=11 // pred_region
          %s244 = ssub.s32 512, 512
          %245 = vsyncadd [#allocation7], %s244
          %s246 = smul.addr %s30, 8
          %s247 = smul.addr %s246, 64
          %s248 = scalar_lea.hbm %s2, %s247
          %s249 = sshll.u32 [#allocation8], 4
          %s250 = int_to_ptr.vmem [resolvable:$true] %s249
          %255 = dma.hbm_to_vmem [thread:$0]  %s248, 512, %s250, [#allocation7], 64, 64, 4
        $region20: #{tpu_custom_call.1} parent=11 // pred_fallthru
          _
        // Predicated region
        $region21: #{tpu_custom_call.1} parent=11 // pred_check
          %p256 = pneg %p136
        $region22: #{tpu_custom_call.1} parent=11 // pred_check_branch
          %258 = sbr.rel (%p256) target = $region24
        $region23: #{tpu_custom_call.1} parent=11 // pred_region
          %s260 = ssub.s32 512, 512
          %261 = vsyncadd [#allocation10], %s260
          %s262 = smul.addr %s30, 8
          %s263 = smul.addr %s262, 64
          %s264 = scalar_lea.hbm %s3, %s263
          %s265 = sshll.u32 [#allocation9], 4
          %s266 = int_to_ptr.vmem [resolvable:$true] %s265
          %271 = dma.hbm_to_vmem [thread:$0]  %s264, 512, %s266, [#allocation10], 64, 64, 4
        $region24: #{tpu_custom_call.1} parent=11 // pred_fallthru
          _
        // Predicated region
        $region25: #{tpu_custom_call.1} parent=11 // pred_check
          %p272 = pneg %p162
        $region26: #{tpu_custom_call.1} parent=11 // pred_check_branch
          %274 = sbr.rel (%p272) target = $region28
        $region27: #{tpu_custom_call.1} parent=11 // pred_region
          %s276 = ssub.s32 512, 512
          %277 = vsyncadd [#allocation10], %s276
          %s278 = smul.addr %s30, 8
          %s279 = smul.addr %s278, 64
          %s280 = scalar_lea.hbm %s4, %s279
          %s281 = sshll.u32 [#allocation11], 4
          %s282 = int_to_ptr.vmem [resolvable:$true] %s281
          %287 = dma.hbm_to_vmem [thread:$0]  %s280, 512, %s282, [#allocation10], 64, 64, 4
        $region28: #{tpu_custom_call.1} parent=11 // pred_fallthru
          _
        // Predicated region
        $region29: #{tpu_custom_call.1} parent=11 // pred_check
          %p288 = pneg %p183
        $region30: #{tpu_custom_call.1} parent=11 // pred_check_branch
          %290 = sbr.rel (%p288) target = $region32
        $region31: #{tpu_custom_call.1} parent=11 // pred_region
          _
        $region32: #{tpu_custom_call.1} parent=11 // pred_fallthru
          _
      $region12: #{tpu_custom_call.1} parent=5 // pred_fallthru
        _
      %p291 = scmp.lt.s32.totalorder %s20, 2
      // Predicated region
      $region33: #{tpu_custom_call.1} parent=5 // pred_check
        %p292 = pneg %p291
      $region34: #{tpu_custom_call.1} parent=5 // pred_check_branch
        %294 = sbr.rel (%p292) target = $region36
      $region35: #{tpu_custom_call.1} parent=5 // pred_region
        // Predicated region
        $region37: #{tpu_custom_call.1} parent=35 // pred_check
          %p295 = pneg %p52
        $region38: #{tpu_custom_call.1} parent=35 // pred_check_branch
          %297 = sbr.rel (%p295) target = $region40
        $region39: #{tpu_custom_call.1} parent=35 // pred_region
          %s298 = sand.u32 %s42, 1
          %s299 = scalar_lea.sflag [#allocation4], %s298
          %s300 = sand.u32 %s42, 1
          %s301 = smul.addr %s300, 4
          %s302 = scalar_lea.vmem [#allocation3], %s301
          %s304 = ssub.s32 64, 64
          %305 = vsyncadd %s299, %s304
          %s306 = smul.addr %s27, 64
          %s307 = scalar_lea.hbm %s0, %s306
          %s309 = sshll.u32 %s302, 4
          %s310 = int_to_ptr.vmem [resolvable:$true] %s309
          %312 = dma.hbm_to_vmem [thread:$0]  %s307, 64, %s310, %s299
        $region40: #{tpu_custom_call.1} parent=35 // pred_fallthru
          _
      $region36: #{tpu_custom_call.1} parent=5 // pred_fallthru
        _
      %p313 = scmp.le.s32.totalorder 1, %s20
      %p314 = scmp.lt.s32.totalorder %s20, 3
      %p315 = pnand %p313, %p314
      %p316 = pneg %p315
      // Predicated region
      $region41: #{tpu_custom_call.1} parent=5 // pred_check
        _
      $region42: #{tpu_custom_call.1} parent=5 // pred_check_branch
        %318 = sbr.rel (%p315) target = $region44
      $region43: #{tpu_custom_call.1} parent=5 // pred_region
        %s319 = ssub.s32 %s20, 1
        %s320 = sand.u32 %s45, 1
        %s321 = scalar_lea.sflag [#allocation4], %s320
        %s322 = sand.u32 %s45, 1
        %s323 = smul.addr %s322, 4
        %s324 = scalar_lea.vmem [#allocation3], %s323
        // Predicated region
        $region45: #{tpu_custom_call.1} parent=43 // pred_check
          %p325 = pneg %p58
        $region46: #{tpu_custom_call.1} parent=43 // pred_check_branch
          %327 = sbr.rel (%p325) target = $region48
        $region47: #{tpu_custom_call.1} parent=43 // pred_region
          %328 = dma.done %s321, 64
        $region48: #{tpu_custom_call.1} parent=43 // pred_fallthru
          _
        // Predicated region
        $region49: #{tpu_custom_call.1} parent=43 // pred_check
          %p329 = pneg %p84
        $region50: #{tpu_custom_call.1} parent=43 // pred_check_branch
          %331 = sbr.rel (%p329) target = $region52
        $region51: #{tpu_custom_call.1} parent=43 // pred_region
          %332 = dma.done [#allocation7], 512
        $region52: #{tpu_custom_call.1} parent=43 // pred_fallthru
          _
        // Predicated region
        $region53: #{tpu_custom_call.1} parent=43 // pred_check
          %p333 = pneg %p110
        $region54: #{tpu_custom_call.1} parent=43 // pred_check_branch
          %335 = sbr.rel (%p333) target = $region56
        $region55: #{tpu_custom_call.1} parent=43 // pred_region
          %336 = dma.done [#allocation7], 512
        $region56: #{tpu_custom_call.1} parent=43 // pred_fallthru
          _
        // Predicated region
        $region57: #{tpu_custom_call.1} parent=43 // pred_check
          %p337 = pneg %p136
        $region58: #{tpu_custom_call.1} parent=43 // pred_check_branch
          %339 = sbr.rel (%p337) target = $region60
        $region59: #{tpu_custom_call.1} parent=43 // pred_region
          %340 = dma.done [#allocation10], 512
        $region60: #{tpu_custom_call.1} parent=43 // pred_fallthru
          _
        // Predicated region
        $region61: #{tpu_custom_call.1} parent=43 // pred_check
          %p341 = pneg %p162
        $region62: #{tpu_custom_call.1} parent=43 // pred_check_branch
          %343 = sbr.rel (%p341) target = $region64
        $region63: #{tpu_custom_call.1} parent=43 // pred_region
          %344 = dma.done [#allocation10], 512
        $region64: #{tpu_custom_call.1} parent=43 // pred_fallthru
          _
        %s345 = sand.u32 %s45, 1
        %s346 = scalar_lea.sflag [#allocation4], %s345
        %s347 = sand.u32 %s45, 1
        %s348 = smul.addr %s347, 4
        %s349 = scalar_lea.vmem [#allocation3], %s348
        %p350 = pneg %p58
        %p351 = pneg %p55
        %p352 = pneg %p84
        %p353 = pneg %p81
        %p354 = pneg %p110
        %p355 = pneg %p107
        %p356 = pneg %p136
        %p357 = pneg %p133
        %p358 = pneg %p162
        %p359 = pneg %p159
        %p360 = pneg %p183
        %p361 = pneg %p180
        %p362 = pneg %p209
        %p363 = pneg %p206
        %s364 = sand.u32 %s196, 1
        %s365 = scalar_lea.sflag [#allocation5], %s364
        %s366 = sand.u32 %s196, 1
        %s367 = smul.addr %s366, 8
        %s368 = scalar_lea.vmem [#allocation12], %s367
        %v370 = vld [vmem:[%s324] sm:$0xf]
        %v371 = vld [vmem:[#allocation6] sm:$0xf]
        %v372 = vld [vmem:[#allocation6 + $0x4] sm:$0xf]
        %v373 = vld [vmem:[#allocation6 + $0x8] sm:$0xf]
        %v374 = vld [vmem:[#allocation6 + $0xc] sm:$0xf]
        %v375 = vld [vmem:[#allocation6 + $0x10] sm:$0xf]
        %v376 = vld [vmem:[#allocation6 + $0x14] sm:$0xf]
        %v377 = vld [vmem:[#allocation6 + $0x18] sm:$0xf]
        %v378 = vld [vmem:[#allocation6 + $0x1c] sm:$0xf]
        %v379 = vld [vmem:[#allocation8] sm:$0xf]
        %v380 = vld [vmem:[#allocation8 + $0x4] sm:$0xf]
        %v381 = vld [vmem:[#allocation8 + $0x8] sm:$0xf]
        %v382 = vld [vmem:[#allocation8 + $0xc] sm:$0xf]
        %v383 = vld [vmem:[#allocation8 + $0x10] sm:$0xf]
        %v384 = vld [vmem:[#allocation8 + $0x14] sm:$0xf]
        %v385 = vld [vmem:[#allocation8 + $0x18] sm:$0xf]
        %v386 = vld [vmem:[#allocation8 + $0x1c] sm:$0xf]
        %v387 = vld [vmem:[#allocation9] sm:$0xf]
        %v388 = vld [vmem:[#allocation9 + $0x4] sm:$0xf]
        %v389 = vld [vmem:[#allocation9 + $0x8] sm:$0xf]
        %v390 = vld [vmem:[#allocation9 + $0xc] sm:$0xf]
        %v391 = vld [vmem:[#allocation9 + $0x10] sm:$0xf]
        %v392 = vld [vmem:[#allocation9 + $0x14] sm:$0xf]
        %v393 = vld [vmem:[#allocation9 + $0x18] sm:$0xf]
        %v394 = vld [vmem:[#allocation9 + $0x1c] sm:$0xf]
        %v395 = vld [vmem:[#allocation11] sm:$0xf]
        %v396 = vld [vmem:[#allocation11 + $0x4] sm:$0xf]
        %v397 = vld [vmem:[#allocation11 + $0x8] sm:$0xf]
        %v398 = vld [vmem:[#allocation11 + $0xc] sm:$0xf]
        %v399 = vld [vmem:[#allocation11 + $0x10] sm:$0xf]
        %v400 = vld [vmem:[#allocation11 + $0x14] sm:$0xf]
        %v401 = vld [vmem:[#allocation11 + $0x18] sm:$0xf]
        %v402 = vld [vmem:[#allocation11 + $0x1c] sm:$0xf]
        %v411 = vunpack.c.l.b16 %v371
        %v412 = vunpack.c.l.b16 %v372
        %v413 = vunpack.c.l.b16 %v373
        %v414 = vunpack.c.l.b16 %v374
        %v415 = vunpack.c.l.b16 %v375
        %v416 = vunpack.c.l.b16 %v376
        %v417 = vunpack.c.l.b16 %v377
        %v418 = vunpack.c.l.b16 %v378
        %v419 = vpack.c.b16 %v412, %v411
        %v420 = vpack.c.b16 %v414, %v413
        %v421 = vpack.c.b16 %v416, %v415
        %v422 = vpack.c.b16 %v418, %v417
        %vm427 = vcmask 523264
        %v429 = vsel %vm427, %v370, 0
        %431 = vmatprep.subr.bf16.mxu0 0
        %432 = vmatpush1.bf16.msra.mxu0 %v419
        %433 = vmatprep.subr.bf16.mxu0 0
        %434 = vmatpush1.bf16.msra.mxu0 %v420
        %435 = vmatprep.subr.bf16.mxu0 0
        %436 = vmatpush1.bf16.msra.mxu0 %v421
        %437 = vmatprep.subr.bf16.mxu0 0
        %438 = vmatpush1.bf16.msra.mxu0 %v422
        %439 = vmatprep.subr.bf16.mxu0 0
        %440 = vmatpush1.bf16.msra.mxu0 0
        %441 = vmatprep.subr.bf16.mxu0 0
        %442 = vmatpush1.bf16.msra.mxu0 0
        %443 = vmatprep.subr.bf16.mxu0 0
        %444 = vmatpush1.bf16.msra.mxu0 0
        %445 = vmatprep.subr.bf16.mxu0 0
        %446 = vmatpush1.bf16.msra.mxu0 0
        %447 = vmatprep.subr.bf16.mxu0 0
        %448 = vmatpush1.bf16.msra.mxu0 0
        %449 = vmatprep.subr.bf16.mxu0 0
        %450 = vmatpush1.bf16.msra.mxu0 0
        %451 = vmatprep.subr.bf16.mxu0 0
        %452 = vmatpush1.bf16.msra.mxu0 0
        %453 = vmatprep.subr.bf16.mxu0 0
        %454 = vmatpush1.bf16.msra.mxu0 0
        %455 = vmatprep.subr.bf16.mxu0 0
        %456 = vmatpush1.bf16.msra.mxu0 0
        %457 = vmatprep.subr.bf16.mxu0 0
        %458 = vmatpush1.bf16.msra.mxu0 0
        %459 = vmatprep.subr.bf16.mxu0 0
        %460 = vmatpush1.bf16.msra.mxu0 0
        %461 = vmatprep.subr.bf16.mxu0 0
        %462 = vmatpush1.bf16.msra.mxu0 0
        %463 = vmatprep.mubr.bf16.mxu0 0
        %464 = vmatmul.mubr.bf16.gmra.mrb[0].mxu0 %v429
        %v465 = vpop.f32.mrb[0].mxu0
        %v466 = vadd.f32 0.0, %v465
        %v467 = vpop.f32.mrb[0].mxu0
        %v468 = vpop.f32.mrb[0].mxu0
        %v469 = vpop.f32.mrb[0].mxu0
        %470 = vdwg.mxu0
        %v479 = vunpack.c.l.b16 %v379
        %v480 = vunpack.c.l.b16 %v380
        %v481 = vunpack.c.l.b16 %v381
        %v482 = vunpack.c.l.b16 %v382
        %v483 = vunpack.c.l.b16 %v383
        %v484 = vunpack.c.l.b16 %v384
        %v485 = vunpack.c.l.b16 %v385
        %v486 = vunpack.c.l.b16 %v386
        %v487 = vpack.c.b16 %v480, %v479
        %v488 = vpack.c.b16 %v482, %v481
        %v489 = vpack.c.b16 %v484, %v483
        %v490 = vpack.c.b16 %v486, %v485
        %495 = vmatprep.subr.bf16.mxu0 0
        %496 = vmatpush1.bf16.msra.mxu0 %v487
        %497 = vmatprep.subr.bf16.mxu0 0
        %498 = vmatpush1.bf16.msra.mxu0 %v488
        %499 = vmatprep.subr.bf16.mxu0 0
        %500 = vmatpush1.bf16.msra.mxu0 %v489
        %501 = vmatprep.subr.bf16.mxu0 0
        %502 = vmatpush1.bf16.msra.mxu0 %v490
        %503 = vmatprep.subr.bf16.mxu0 0
        %504 = vmatpush1.bf16.msra.mxu0 0
        %505 = vmatprep.subr.bf16.mxu0 0
        %506 = vmatpush1.bf16.msra.mxu0 0
        %507 = vmatprep.subr.bf16.mxu0 0
        %508 = vmatpush1.bf16.msra.mxu0 0
        %509 = vmatprep.subr.bf16.mxu0 0
        %510 = vmatpush1.bf16.msra.mxu0 0
        %511 = vmatprep.subr.bf16.mxu0 0
        %512 = vmatpush1.bf16.msra.mxu0 0
        %513 = vmatprep.subr.bf16.mxu0 0
        %514 = vmatpush1.bf16.msra.mxu0 0
        %515 = vmatprep.subr.bf16.mxu0 0
        %516 = vmatpush1.bf16.msra.mxu0 0
        %517 = vmatprep.subr.bf16.mxu0 0
        %518 = vmatpush1.bf16.msra.mxu0 0
        %519 = vmatprep.subr.bf16.mxu0 0
        %520 = vmatpush1.bf16.msra.mxu0 0
        %521 = vmatprep.subr.bf16.mxu0 0
        %522 = vmatpush1.bf16.msra.mxu0 0
        %523 = vmatprep.subr.bf16.mxu0 0
        %524 = vmatpush1.bf16.msra.mxu0 0
        %525 = vmatprep.subr.bf16.mxu0 0
        %526 = vmatpush1.bf16.msra.mxu0 0
        %527 = vmatprep.mubr.bf16.mxu0 0
        %528 = vmatmul.mubr.bf16.gmra.mrb[0].mxu0 %v429
        %v529 = vpop.f32.mrb[0].mxu0
        %v530 = vadd.f32 0.0, %v529
        %v531 = vpop.f32.mrb[0].mxu0
        %v532 = vpop.f32.mrb[0].mxu0
        %v533 = vpop.f32.mrb[0].mxu0
        %534 = vdwg.mxu0
        %v543 = vunpack.c.l.b16 %v387
        %v544 = vunpack.c.l.b16 %v388
        %v545 = vunpack.c.l.b16 %v389
        %v546 = vunpack.c.l.b16 %v390
        %v547 = vunpack.c.l.b16 %v391
        %v548 = vunpack.c.l.b16 %v392
        %v549 = vunpack.c.l.b16 %v393
        %v550 = vunpack.c.l.b16 %v394
        %v551 = vpack.c.b16 %v544, %v543
        %v552 = vpack.c.b16 %v546, %v545
        %v553 = vpack.c.b16 %v548, %v547
        %v554 = vpack.c.b16 %v550, %v549
        %559 = vmatprep.subr.bf16.mxu0 0
        %560 = vmatpush1.bf16.msra.mxu0 %v551
        %561 = vmatprep.subr.bf16.mxu0 0
        %562 = vmatpush1.bf16.msra.mxu0 %v552
        %563 = vmatprep.subr.bf16.mxu0 0
        %564 = vmatpush1.bf16.msra.mxu0 %v553
        %565 = vmatprep.subr.bf16.mxu0 0
        %566 = vmatpush1.bf16.msra.mxu0 %v554
        %567 = vmatprep.subr.bf16.mxu0 0
        %568 = vmatpush1.bf16.msra.mxu0 0
        %569 = vmatprep.subr.bf16.mxu0 0
        %570 = vmatpush1.bf16.msra.mxu0 0
        %571 = vmatprep.subr.bf16.mxu0 0
        %572 = vmatpush1.bf16.msra.mxu0 0
        %573 = vmatprep.subr.bf16.mxu0 0
        %574 = vmatpush1.bf16.msra.mxu0 0
        %575 = vmatprep.subr.bf16.mxu0 0
        %576 = vmatpush1.bf16.msra.mxu0 0
        %577 = vmatprep.subr.bf16.mxu0 0
        %578 = vmatpush1.bf16.msra.mxu0 0
        %579 = vmatprep.subr.bf16.mxu0 0
        %580 = vmatpush1.bf16.msra.mxu0 0
        %581 = vmatprep.subr.bf16.mxu0 0
        %582 = vmatpush1.bf16.msra.mxu0 0
        %583 = vmatprep.subr.bf16.mxu0 0
        %584 = vmatpush1.bf16.msra.mxu0 0
        %585 = vmatprep.subr.bf16.mxu0 0
        %586 = vmatpush1.bf16.msra.mxu0 0
        %587 = vmatprep.subr.bf16.mxu0 0
        %588 = vmatpush1.bf16.msra.mxu0 0
        %589 = vmatprep.subr.bf16.mxu0 0
        %590 = vmatpush1.bf16.msra.mxu0 0
        %591 = vmatprep.mubr.bf16.mxu0 0
        %592 = vmatmul.mubr.bf16.gmra.mrb[0].mxu0 %v429
        %v593 = vpop.f32.mrb[0].mxu0
        %v594 = vadd.f32 0.0, %v593
        %v595 = vpop.f32.mrb[0].mxu0
        %v596 = vpop.f32.mrb[0].mxu0
        %v597 = vpop.f32.mrb[0].mxu0
        %598 = vdwg.mxu0
        %v599 = vpack.c.bf16 %v466, %v466
        %v600 = vpack.c.bf16 %v530, %v530
        %v601 = vpack.c.bf16 %v594, %v594
        %vm602 = vcmask 64512
        %v604 = vsel %vm602, %v599, 0
        %v607 = vsel %vm602, %v600, 0
        %609 = vmatprep.subr.bf16.mxu0 0
        %610 = vmatpush1.bf16.xpose.msra.mxu0 %v607
        %611 = vmatprep.subr.bf16.mxu0 0
        %612 = vmatpush1.bf16.xpose.msra.mxu0 0
        %613 = vmatprep.subr.bf16.mxu0 0
        %614 = vmatpush1.bf16.xpose.msra.mxu0 0
        %615 = vmatprep.subr.bf16.mxu0 0
        %616 = vmatpush1.bf16.xpose.msra.mxu0 0
        %617 = vmatprep.subr.bf16.mxu0 0
        %618 = vmatpush1.bf16.xpose.msra.mxu0 0
        %619 = vmatprep.subr.bf16.mxu0 0
        %620 = vmatpush1.bf16.xpose.msra.mxu0 0
        %621 = vmatprep.subr.bf16.mxu0 0
        %622 = vmatpush1.bf16.xpose.msra.mxu0 0
        %623 = vmatprep.subr.bf16.mxu0 0
        %624 = vmatpush1.bf16.xpose.msra.mxu0 0
        %625 = vmatprep.subr.bf16.mxu0 0
        %626 = vmatpush1.bf16.xpose.msra.mxu0 0
        %627 = vmatprep.subr.bf16.mxu0 0
        %628 = vmatpush1.bf16.xpose.msra.mxu0 0
        %629 = vmatprep.subr.bf16.mxu0 0
        %630 = vmatpush1.bf16.xpose.msra.mxu0 0
        %631 = vmatprep.subr.bf16.mxu0 0
        %632 = vmatpush1.bf16.xpose.msra.mxu0 0
        %633 = vmatprep.subr.bf16.mxu0 0
        %634 = vmatpush1.bf16.xpose.msra.mxu0 0
        %635 = vmatprep.subr.bf16.mxu0 0
        %636 = vmatpush1.bf16.xpose.msra.mxu0 0
        %637 = vmatprep.subr.bf16.mxu0 0
        %638 = vmatpush1.bf16.xpose.msra.mxu0 0
        %639 = vmatprep.subr.bf16.mxu0 0
        %640 = vmatpush1.bf16.xpose.msra.mxu0 0
        %641 = vmatprep.mubr.bf16.mxu0 0
        %642 = vmatmul.mubr.bf16.gmra.mrb[0].mxu0 %v604
        %v643 = vpop.f32.mrb[0].mxu0
        %v644 = vadd.f32 0.0, %v643
        %v645 = vpop.f32.mrb[0].mxu0
        %v646 = vpop.f32.mrb[0].mxu0
        %v647 = vpop.f32.mrb[0].mxu0
        %648 = vdwg.mxu0
        %v649 = vsel %vm602, %v644, -inf
        %650 = vmax.xlane.f32.xlu0 %v649
        %v651 = vpop.xlane.xlu0 %650
        %v652 = vsub.f32 %v644, %v651
        %v653 = vmul.f32 %v652, 1.442695
        %v654 = vpow.pop %v653
        %v655 = vsel %vm602, %v654, 0.0
        %656 = vadd.xlane.f32.xlu0 %v655
        %v657 = vpop.xlane.xlu0 %656
        %v658 = vrcp.pop %v657
        %v659 = vmul.f32 %v657, %v658
        %v660 = vsub.f32 2.0, %v659
        %v661 = vmul.f32 %v658, %v660
        %v662 = vpack.c.bf16 %v654, %v654
        %v664 = vsel %vm602, %v662, 0
        %vm666 = vcmask 1043456
        %v668 = vsel %vm666, %v601, 0
        %670 = vmatprep.subr.bf16.mxu0 0
        %671 = vmatpush1.bf16.msra.mxu0 %v668
        %672 = vmatprep.subr.bf16.mxu0 0
        %673 = vmatpush1.bf16.msra.mxu0 0
        %674 = vmatprep.subr.bf16.mxu0 0
        %675 = vmatpush1.bf16.msra.mxu0 0
        %676 = vmatprep.subr.bf16.mxu0 0
        %677 = vmatpush1.bf16.msra.mxu0 0
        %678 = vmatprep.subr.bf16.mxu0 0
        %679 = vmatpush1.bf16.msra.mxu0 0
        %680 = vmatprep.subr.bf16.mxu0 0
        %681 = vmatpush1.bf16.msra.mxu0 0
        %682 = vmatprep.subr.bf16.mxu0 0
        %683 = vmatpush1.bf16.msra.mxu0 0
        %684 = vmatprep.subr.bf16.mxu0 0
        %685 = vmatpush1.bf16.msra.mxu0 0
        %686 = vmatprep.subr.bf16.mxu0 0
        %687 = vmatpush1.bf16.msra.mxu0 0
        %688 = vmatprep.subr.bf16.mxu0 0
        %689 = vmatpush1.bf16.msra.mxu0 0
        %690 = vmatprep.subr.bf16.mxu0 0
        %691 = vmatpush1.bf16.msra.mxu0 0
        %692 = vmatprep.subr.bf16.mxu0 0
        %693 = vmatpush1.bf16.msra.mxu0 0
        %694 = vmatprep.subr.bf16.mxu0 0
        %695 = vmatpush1.bf16.msra.mxu0 0
        %696 = vmatprep.subr.bf16.mxu0 0
        %697 = vmatpush1.bf16.msra.mxu0 0
        %698 = vmatprep.subr.bf16.mxu0 0
        %699 = vmatpush1.bf16.msra.mxu0 0
        %700 = vmatprep.subr.bf16.mxu0 0
        %701 = vmatpush1.bf16.msra.mxu0 0
        %702 = vmatprep.mubr.bf16.mxu0 0
        %703 = vmatmul.mubr.bf16.gmra.mrb[0].mxu0 %v664
        %v704 = vpop.f32.mrb[0].mxu0
        %v705 = vadd.f32 0.0, %v704
        %v706 = vpop.f32.mrb[0].mxu0
        %v707 = vpop.f32.mrb[0].mxu0
        %v708 = vpop.f32.mrb[0].mxu0
        %709 = vdwg.mxu0
        %v710 = vmul.f32 %v705, %v661
        %711 = vst.msk [vmem:[#allocation2] sm:$0xff] %vm602, %v710
        %713 = vrot.lane.b32.xlu0 %v599, 120
        %v714 = vpop.permute.xlu0 %713
        %716 = vrot.lane.b32.xlu0 %v600, 120
        %v717 = vpop.permute.xlu0 %716
        %v719 = vsel %vm602, %v714, 0
        %v722 = vsel %vm602, %v717, 0
        %724 = vmatprep.subr.bf16.mxu0 0
        %725 = vmatpush1.bf16.xpose.msra.mxu0 %v722
        %726 = vmatprep.subr.bf16.mxu0 0
        %727 = vmatpush1.bf16.xpose.msra.mxu0 0
        %728 = vmatprep.subr.bf16.mxu0 0
        %729 = vmatpush1.bf16.xpose.msra.mxu0 0
        %730 = vmatprep.subr.bf16.mxu0 0
        %731 = vmatpush1.bf16.xpose.msra.mxu0 0
        %732 = vmatprep.subr.bf16.mxu0 0
        %733 = vmatpush1.bf16.xpose.msra.mxu0 0
        %734 = vmatprep.subr.bf16.mxu0 0
        %735 = vmatpush1.bf16.xpose.msra.mxu0 0
        %736 = vmatprep.subr.bf16.mxu0 0
        %737 = vmatpush1.bf16.xpose.msra.mxu0 0
        %738 = vmatprep.subr.bf16.mxu0 0
        %739 = vmatpush1.bf16.xpose.msra.mxu0 0
        %740 = vmatprep.subr.bf16.mxu0 0
        %741 = vmatpush1.bf16.xpose.msra.mxu0 0
        %742 = vmatprep.subr.bf16.mxu0 0
        %743 = vmatpush1.bf16.xpose.msra.mxu0 0
        %744 = vmatprep.subr.bf16.mxu0 0
        %745 = vmatpush1.bf16.xpose.msra.mxu0 0
        %746 = vmatprep.subr.bf16.mxu0 0
        %747 = vmatpush1.bf16.xpose.msra.mxu0 0
        %748 = vmatprep.subr.bf16.mxu0 0
        %749 = vmatpush1.bf16.xpose.msra.mxu0 0
        %750 = vmatprep.subr.bf16.mxu0 0
        %751 = vmatpush1.bf16.xpose.msra.mxu0 0
        %752 = vmatprep.subr.bf16.mxu0 0
        %753 = vmatpush1.bf16.xpose.msra.mxu0 0
        %754 = vmatprep.subr.bf16.mxu0 0
        %755 = vmatpush1.bf16.xpose.msra.mxu0 0
        %756 = vmatprep.mubr.bf16.mxu0 0
        %757 = vmatmul.mubr.bf16.gmra.mrb[0].mxu0 %v719
        %v758 = vpop.f32.mrb[0].mxu0
        %v759 = vadd.f32 0.0, %v758
        %v760 = vpop.f32.mrb[0].mxu0
        %v761 = vpop.f32.mrb[0].mxu0
        %v762 = vpop.f32.mrb[0].mxu0
        %763 = vdwg.mxu0
        %v764 = vsel %vm602, %v759, -inf
        %765 = vmax.xlane.f32.xlu0 %v764
        %v766 = vpop.xlane.xlu0 %765
        %v767 = vsub.f32 %v759, %v766
        %v768 = vmul.f32 %v767, 1.442695
        %v769 = vpow.pop %v768
        %v770 = vsel %vm602, %v769, 0.0
        %771 = vadd.xlane.f32.xlu0 %v770
        %v772 = vpop.xlane.xlu0 %771
        %v773 = vrcp.pop %v772
        %v774 = vmul.f32 %v772, %v773
        %v775 = vsub.f32 2.0, %v774
        %v776 = vmul.f32 %v773, %v775
        %v777 = vpack.c.bf16 %v769, %v769
        %779 = vrot.lane.b32.xlu0 %v601, 120
        %v780 = vpop.permute.xlu0 %779
        %v782 = vsel %vm602, %v777, 0
        %v785 = vsel %vm666, %v780, 0
        %787 = vmatprep.subr.bf16.mxu0 0
        %788 = vmatpush1.bf16.msra.mxu0 %v785
        %789 = vmatprep.subr.bf16.mxu0 0
        %790 = vmatpush1.bf16.msra.mxu0 0
        %791 = vmatprep.subr.bf16.mxu0 0
        %792 = vmatpush1.bf16.msra.mxu0 0
        %793 = vmatprep.subr.bf16.mxu0 0
        %794 = vmatpush1.bf16.msra.mxu0 0
        %795 = vmatprep.subr.bf16.mxu0 0
        %796 = vmatpush1.bf16.msra.mxu0 0
        %797 = vmatprep.subr.bf16.mxu0 0
        %798 = vmatpush1.bf16.msra.mxu0 0
        %799 = vmatprep.subr.bf16.mxu0 0
        %800 = vmatpush1.bf16.msra.mxu0 0
        %801 = vmatprep.subr.bf16.mxu0 0
        %802 = vmatpush1.bf16.msra.mxu0 0
        %803 = vmatprep.subr.bf16.mxu0 0
        %804 = vmatpush1.bf16.msra.mxu0 0
        %805 = vmatprep.subr.bf16.mxu0 0
        %806 = vmatpush1.bf16.msra.mxu0 0
        %807 = vmatprep.subr.bf16.mxu0 0
        %808 = vmatpush1.bf16.msra.mxu0 0
        %809 = vmatprep.subr.bf16.mxu0 0
        %810 = vmatpush1.bf16.msra.mxu0 0
        %811 = vmatprep.subr.bf16.mxu0 0
        %812 = vmatpush1.bf16.msra.mxu0 0
        %813 = vmatprep.subr.bf16.mxu0 0
        %814 = vmatpush1.bf16.msra.mxu0 0
        %815 = vmatprep.subr.bf16.mxu0 0
        %816 = vmatpush1.bf16.msra.mxu0 0
        %817 = vmatprep.subr.bf16.mxu0 0
        %818 = vmatpush1.bf16.msra.mxu0 0
        %819 = vmatprep.mubr.bf16.mxu0 0
        %820 = vmatmul.mubr.bf16.gmra.mrb[0].mxu0 %v782
        %v821 = vpop.f32.mrb[0].mxu0
        %v822 = vadd.f32 0.0, %v821
        %v823 = vpop.f32.mrb[0].mxu0
        %v824 = vpop.f32.mrb[0].mxu0
        %v825 = vpop.f32.mrb[0].mxu0
        %826 = vdwg.mxu0
        %v827 = vmul.f32 %v822, %v776
        %829 = vrot.lane.b32.xlu0 %v827, 8
        %v830 = vpop.permute.xlu0 %829
        %vm832 = vcmask 130112
        %833 = vst.msk [vmem:[#allocation2] sm:$0xff] %vm832, %v830
        %834 = vrot.lane.b32.xlu0 %v599, 112
        %v835 = vpop.permute.xlu0 %834
        %836 = vrot.lane.b32.xlu0 %v600, 112
        %v837 = vpop.permute.xlu0 %836
        %v839 = vsel %vm602, %v835, 0
        %v842 = vsel %vm602, %v837, 0
        %844 = vmatprep.subr.bf16.mxu0 0
        %845 = vmatpush1.bf16.xpose.msra.mxu0 %v842
        %846 = vmatprep.subr.bf16.mxu0 0
        %847 = vmatpush1.bf16.xpose.msra.mxu0 0
        %848 = vmatprep.subr.bf16.mxu0 0
        %849 = vmatpush1.bf16.xpose.msra.mxu0 0
        %850 = vmatprep.subr.bf16.mxu0 0
        %851 = vmatpush1.bf16.xpose.msra.mxu0 0
        %852 = vmatprep.subr.bf16.mxu0 0
        %853 = vmatpush1.bf16.xpose.msra.mxu0 0
        %854 = vmatprep.subr.bf16.mxu0 0
        %855 = vmatpush1.bf16.xpose.msra.mxu0 0
        %856 = vmatprep.subr.bf16.mxu0 0
        %857 = vmatpush1.bf16.xpose.msra.mxu0 0
        %858 = vmatprep.subr.bf16.mxu0 0
        %859 = vmatpush1.bf16.xpose.msra.mxu0 0
        %860 = vmatprep.subr.bf16.mxu0 0
        %861 = vmatpush1.bf16.xpose.msra.mxu0 0
        %862 = vmatprep.subr.bf16.mxu0 0
        %863 = vmatpush1.bf16.xpose.msra.mxu0 0
        %864 = vmatprep.subr.bf16.mxu0 0
        %865 = vmatpush1.bf16.xpose.msra.mxu0 0
        %866 = vmatprep.subr.bf16.mxu0 0
        %867 = vmatpush1.bf16.xpose.msra.mxu0 0
        %868 = vmatprep.subr.bf16.mxu0 0
        %869 = vmatpush1.bf16.xpose.msra.mxu0 0
        %870 = vmatprep.subr.bf16.mxu0 0
        %871 = vmatpush1.bf16.xpose.msra.mxu0 0
        %872 = vmatprep.subr.bf16.mxu0 0
        %873 = vmatpush1.bf16.xpose.msra.mxu0 0
        %874 = vmatprep.subr.bf16.mxu0 0
        %875 = vmatpush1.bf16.xpose.msra.mxu0 0
        %876 = vmatprep.mubr.bf16.mxu0 0
        %877 = vmatmul.mubr.bf16.gmra.mrb[0].mxu0 %v839
        %v878 = vpop.f32.mrb[0].mxu0
        %v879 = vadd.f32 0.0, %v878
        %v880 = vpop.f32.mrb[0].mxu0
        %v881 = vpop.f32.mrb[0].mxu0
        %v882 = vpop.f32.mrb[0].mxu0
        %883 = vdwg.mxu0
        %v884 = vsel %vm602, %v879, -inf
        %885 = vmax.xlane.f32.xlu0 %v884
        %v886 = vpop.xlane.xlu0 %885
        %v887 = vsub.f32 %v879, %v886
        %v888 = vmul.f32 %v887, 1.442695
        %v889 = vpow.pop %v888
        %v890 = vsel %vm602, %v889, 0.0
        %891 = vadd.xlane.f32.xlu0 %v890
        %v892 = vpop.xlane.xlu0 %891
        %v893 = vrcp.pop %v892
        %v894 = vmul.f32 %v892, %v893
        %v895 = vsub.f32 2.0, %v894
        %v896 = vmul.f32 %v893, %v895
        %v897 = vpack.c.bf16 %v889, %v889
        %898 = vrot.lane.b32.xlu0 %v601, 112
        %v899 = vpop.permute.xlu0 %898
        %v901 = vsel %vm602, %v897, 0
        %v904 = vsel %vm666, %v899, 0
        %906 = vmatprep.subr.bf16.mxu0 0
        %907 = vmatpush1.bf16.msra.mxu0 %v904
        %908 = vmatprep.subr.bf16.mxu0 0
        %909 = vmatpush1.bf16.msra.mxu0 0
        %910 = vmatprep.subr.bf16.mxu0 0
        %911 = vmatpush1.bf16.msra.mxu0 0
        %912 = vmatprep.subr.bf16.mxu0 0
        %913 = vmatpush1.bf16.msra.mxu0 0
        %914 = vmatprep.subr.bf16.mxu0 0
        %915 = vmatpush1.bf16.msra.mxu0 0
        %916 = vmatprep.subr.bf16.mxu0 0
        %917 = vmatpush1.bf16.msra.mxu0 0
        %918 = vmatprep.subr.bf16.mxu0 0
        %919 = vmatpush1.bf16.msra.mxu0 0
        %920 = vmatprep.subr.bf16.mxu0 0
        %921 = vmatpush1.bf16.msra.mxu0 0
        %922 = vmatprep.subr.bf16.mxu0 0
        %923 = vmatpush1.bf16.msra.mxu0 0
        %924 = vmatprep.subr.bf16.mxu0 0
        %925 = vmatpush1.bf16.msra.mxu0 0
        %926 = vmatprep.subr.bf16.mxu0 0
        %927 = vmatpush1.bf16.msra.mxu0 0
        %928 = vmatprep.subr.bf16.mxu0 0
        %929 = vmatpush1.bf16.msra.mxu0 0
        %930 = vmatprep.subr.bf16.mxu0 0
        %931 = vmatpush1.bf16.msra.mxu0 0
        %932 = vmatprep.subr.bf16.mxu0 0
        %933 = vmatpush1.bf16.msra.mxu0 0
        %934 = vmatprep.subr.bf16.mxu0 0
        %935 = vmatpush1.bf16.msra.mxu0 0
        %936 = vmatprep.subr.bf16.mxu0 0
        %937 = vmatpush1.bf16.msra.mxu0 0
        %938 = vmatprep.mubr.bf16.mxu0 0
        %939 = vmatmul.mubr.bf16.gmra.mrb[0].mxu0 %v901
        %v940 = vpop.f32.mrb[0].mxu0
        %v941 = vadd.f32 0.0, %v940
        %v942 = vpop.f32.mrb[0].mxu0
        %v943 = vpop.f32.mrb[0].mxu0
        %v944 = vpop.f32.mrb[0].mxu0
        %945 = vdwg.mxu0
        %v946 = vmul.f32 %v941, %v896
        %948 = vrot.lane.b32.xlu0 %v946, 16
        %v949 = vpop.permute.xlu0 %948
        %vm951 = vcmask 195712
        %952 = vst.msk [vmem:[#allocation2] sm:$0xff] %vm951, %v949
        %953 = vrot.lane.b32.xlu0 %v599, 104
        %v954 = vpop.permute.xlu0 %953
        %955 = vrot.lane.b32.xlu0 %v600, 104
        %v956 = vpop.permute.xlu0 %955
        %v958 = vsel %vm602, %v954, 0
        %v961 = vsel %vm602, %v956, 0
        %963 = vmatprep.subr.bf16.mxu0 0
        %964 = vmatpush1.bf16.xpose.msra.mxu0 %v961
        %965 = vmatprep.subr.bf16.mxu0 0
        %966 = vmatpush1.bf16.xpose.msra.mxu0 0
        %967 = vmatprep.subr.bf16.mxu0 0
        %968 = vmatpush1.bf16.xpose.msra.mxu0 0
        %969 = vmatprep.subr.bf16.mxu0 0
        %970 = vmatpush1.bf16.xpose.msra.mxu0 0
        %971 = vmatprep.subr.bf16.mxu0 0
        %972 = vmatpush1.bf16.xpose.msra.mxu0 0
        %973 = vmatprep.subr.bf16.mxu0 0
        %974 = vmatpush1.bf16.xpose.msra.mxu0 0
        %975 = vmatprep.subr.bf16.mxu0 0
        %976 = vmatpush1.bf16.xpose.msra.mxu0 0
        %977 = vmatprep.subr.bf16.mxu0 0
        %978 = vmatpush1.bf16.xpose.msra.mxu0 0
        %979 = vmatprep.subr.bf16.mxu0 0
        %980 = vmatpush1.bf16.xpose.msra.mxu0 0
        %981 = vmatprep.subr.bf16.mxu0 0
        %982 = vmatpush1.bf16.xpose.msra.mxu0 0
        %983 = vmatprep.subr.bf16.mxu0 0
        %984 = vmatpush1.bf16.xpose.msra.mxu0 0
        %985 = vmatprep.subr.bf16.mxu0 0
        %986 = vmatpush1.bf16.xpose.msra.mxu0 0
        %987 = vmatprep.subr.bf16.mxu0 0
        %988 = vmatpush1.bf16.xpose.msra.mxu0 0
        %989 = vmatprep.subr.bf16.mxu0 0
        %990 = vmatpush1.bf16.xpose.msra.mxu0 0
        %991 = vmatprep.subr.bf16.mxu0 0
        %992 = vmatpush1.bf16.xpose.msra.mxu0 0
        %993 = vmatprep.subr.bf16.mxu0 0
        %994 = vmatpush1.bf16.xpose.msra.mxu0 0
        %995 = vmatprep.mubr.bf16.mxu0 0
        %996 = vmatmul.mubr.bf16.gmra.mrb[0].mxu0 %v958
        %v997 = vpop.f32.mrb[0].mxu0
        %v998 = vadd.f32 0.0, %v997
        %v999 = vpop.f32.mrb[0].mxu0
        %v1000 = vpop.f32.mrb[0].mxu0
        %v1001 = vpop.f32.mrb[0].mxu0
        %1002 = vdwg.mxu0
        %v1003 = vsel %vm602, %v998, -inf
        %1004 = vmax.xlane.f32.xlu0 %v1003
        %v1005 = vpop.xlane.xlu0 %1004
        %v1006 = vsub.f32 %v998, %v1005
        %v1007 = vmul.f32 %v1006, 1.442695
        %v1008 = vpow.pop %v1007
        %v1009 = vsel %vm602, %v1008, 0.0
        %1010 = vadd.xlane.f32.xlu0 %v1009
        %v1011 = vpop.xlane.xlu0 %1010
        %v1012 = vrcp.pop %v1011
        %v1013 = vmul.f32 %v1011, %v1012
        %v1014 = vsub.f32 2.0, %v1013
        %v1015 = vmul.f32 %v1012, %v1014
        %v1016 = vpack.c.bf16 %v1008, %v1008
        %1017 = vrot.lane.b32.xlu0 %v601, 104
        %v1018 = vpop.permute.xlu0 %1017
        %v1020 = vsel %vm602, %v1016, 0
        %v1023 = vsel %vm666, %v1018, 0
        %1025 = vmatprep.subr.bf16.mxu0 0
        %1026 = vmatpush1.bf16.msra.mxu0 %v1023
        %1027 = vmatprep.subr.bf16.mxu0 0
        %1028 = vmatpush1.bf16.msra.mxu0 0
        %1029 = vmatprep.subr.bf16.mxu0 0
        %1030 = vmatpush1.bf16.msra.mxu0 0
        %1031 = vmatprep.subr.bf16.mxu0 0
        %1032 = vmatpush1.bf16.msra.mxu0 0
        %1033 = vmatprep.subr.bf16.mxu0 0
        %1034 = vmatpush1.bf16.msra.mxu0 0
        %1035 = vmatprep.subr.bf16.mxu0 0
        %1036 = vmatpush1.bf16.msra.mxu0 0
        %1037 = vmatprep.subr.bf16.mxu0 0
        %1038 = vmatpush1.bf16.msra.mxu0 0
        %1039 = vmatprep.subr.bf16.mxu0 0
        %1040 = vmatpush1.bf16.msra.mxu0 0
        %1041 = vmatprep.subr.bf16.mxu0 0
        %1042 = vmatpush1.bf16.msra.mxu0 0
        %1043 = vmatprep.subr.bf16.mxu0 0
        %1044 = vmatpush1.bf16.msra.mxu0 0
        %1045 = vmatprep.subr.bf16.mxu0 0
        %1046 = vmatpush1.bf16.msra.mxu0 0
        %1047 = vmatprep.subr.bf16.mxu0 0
        %1048 = vmatpush1.bf16.msra.mxu0 0
        %1049 = vmatprep.subr.bf16.mxu0 0
        %1050 = vmatpush1.bf16.msra.mxu0 0
        %1051 = vmatprep.subr.bf16.mxu0 0
        %1052 = vmatpush1.bf16.msra.mxu0 0
        %1053 = vmatprep.subr.bf16.mxu0 0
        %1054 = vmatpush1.bf16.msra.mxu0 0
        %1055 = vmatprep.subr.bf16.mxu0 0
        %1056 = vmatpush1.bf16.msra.mxu0 0
        %1057 = vmatprep.mubr.bf16.mxu0 0
        %1058 = vmatmul.mubr.bf16.gmra.mrb[0].mxu0 %v1020
        %v1059 = vpop.f32.mrb[0].mxu0
        %v1060 = vadd.f32 0.0, %v1059
        %v1061 = vpop.f32.mrb[0].mxu0
        %v1062 = vpop.f32.mrb[0].mxu0
        %v1063 = vpop.f32.mrb[0].mxu0
        %1064 = vdwg.mxu0
        %v1065 = vmul.f32 %v1060, %v1015
        %1067 = vrot.lane.b32.xlu0 %v1065, 24
        %v1068 = vpop.permute.xlu0 %1067
        %vm1070 = vcmask 261312
        %1071 = vst.msk [vmem:[#allocation2] sm:$0xff] %vm1070, %v1068
        %1072 = vrot.lane.b32.xlu0 %v599, 96
        %v1073 = vpop.permute.xlu0 %1072
        %1074 = vrot.lane.b32.xlu0 %v600, 96
        %v1075 = vpop.permute.xlu0 %1074
        %v1077 = vsel %vm602, %v1073, 0
        %v1080 = vsel %vm602, %v1075, 0
        %1082 = vmatprep.subr.bf16.mxu0 0
        %1083 = vmatpush1.bf16.xpose.msra.mxu0 %v1080
        %1084 = vmatprep.subr.bf16.mxu0 0
        %1085 = vmatpush1.bf16.xpose.msra.mxu0 0
        %1086 = vmatprep.subr.bf16.mxu0 0
        %1087 = vmatpush1.bf16.xpose.msra.mxu0 0
        %1088 = vmatprep.subr.bf16.mxu0 0
        %1089 = vmatpush1.bf16.xpose.msra.mxu0 0
        %1090 = vmatprep.subr.bf16.mxu0 0
        %1091 = vmatpush1.bf16.xpose.msra.mxu0 0
        %1092 = vmatprep.subr.bf16.mxu0 0
        %1093 = vmatpush1.bf16.xpose.msra.mxu0 0
        %1094 = vmatprep.subr.bf16.mxu0 0
        %1095 = vmatpush1.bf16.xpose.msra.mxu0 0
        %1096 = vmatprep.subr.bf16.mxu0 0
        %1097 = vmatpush1.bf16.xpose.msra.mxu0 0
        %1098 = vmatprep.subr.bf16.mxu0 0
        %1099 = vmatpush1.bf16.xpose.msra.mxu0 0
        %1100 = vmatprep.subr.bf16.mxu0 0
        %1101 = vmatpush1.bf16.xpose.msra.mxu0 0
        %1102 = vmatprep.subr.bf16.mxu0 0
        %1103 = vmatpush1.bf16.xpose.msra.mxu0 0
        %1104 = vmatprep.subr.bf16.mxu0 0
        %1105 = vmatpush1.bf16.xpose.msra.mxu0 0
        %1106 = vmatprep.subr.bf16.mxu0 0
        %1107 = vmatpush1.bf16.xpose.msra.mxu0 0
        %1108 = vmatprep.subr.bf16.mxu0 0
        %1109 = vmatpush1.bf16.xpose.msra.mxu0 0
        %1110 = vmatprep.subr.bf16.mxu0 0
        %1111 = vmatpush1.bf16.xpose.msra.mxu0 0
        %1112 = vmatprep.subr.bf16.mxu0 0
        %1113 = vmatpush1.bf16.xpose.msra.mxu0 0
        %1114 = vmatprep.mubr.bf16.mxu0 0
        %1115 = vmatmul.mubr.bf16.gmra.mrb[0].mxu0 %v1077
        %v1116 = vpop.f32.mrb[0].mxu0
        %v1117 = vadd.f32 0.0, %v1116
        %v1118 = vpop.f32.mrb[0].mxu0
        %v1119 = vpop.f32.mrb[0].mxu0
        %v1120 = vpop.f32.mrb[0].mxu0
        %1121 = vdwg.mxu0
        %v1122 = vsel %vm602, %v1117, -inf
        %1123 = vmax.xlane.f32.xlu0 %v1122
        %v1124 = vpop.xlane.xlu0 %1123
        %v1125 = vsub.f32 %v1117, %v1124
        %v1126 = vmul.f32 %v1125, 1.442695
        %v1127 = vpow.pop %v1126
        %v1128 = vsel %vm602, %v1127, 0.0
        %1129 = vadd.xlane.f32.xlu0 %v1128
        %v1130 = vpop.xlane.xlu0 %1129
        %v1131 = vrcp.pop %v1130
        %v1132 = vmul.f32 %v1130, %v1131
        %v1133 = vsub.f32 2.0, %v1132
        %v1134 = vmul.f32 %v1131, %v1133
        %v1135 = vpack.c.bf16 %v1127, %v1127
        %1136 = vrot.lane.b32.xlu0 %v601, 96
        %v1137 = vpop.permute.xlu0 %1136
        %v1139 = vsel %vm602, %v1135, 0
        %v1142 = vsel %vm666, %v1137, 0
        %1144 = vmatprep.subr.bf16.mxu0 0
        %1145 = vmatpush1.bf16.msra.mxu0 %v1142
        %1146 = vmatprep.subr.bf16.mxu0 0
        %1147 = vmatpush1.bf16.msra.mxu0 0
        %1148 = vmatprep.subr.bf16.mxu0 0
        %1149 = vmatpush1.bf16.msra.mxu0 0
        %1150 = vmatprep.subr.bf16.mxu0 0
        %1151 = vmatpush1.bf16.msra.mxu0 0
        %1152 = vmatprep.subr.bf16.mxu0 0
        %1153 = vmatpush1.bf16.msra.mxu0 0
        %1154 = vmatprep.subr.bf16.mxu0 0
        %1155 = vmatpush1.bf16.msra.mxu0 0
        %1156 = vmatprep.subr.bf16.mxu0 0
        %1157 = vmatpush1.bf16.msra.mxu0 0
        %1158 = vmatprep.subr.bf16.mxu0 0
        %1159 = vmatpush1.bf16.msra.mxu0 0
        %1160 = vmatprep.subr.bf16.mxu0 0
        %1161 = vmatpush1.bf16.msra.mxu0 0
        %1162 = vmatprep.subr.bf16.mxu0 0
        %1163 = vmatpush1.bf16.msra.mxu0 0
        %1164 = vmatprep.subr.bf16.mxu0 0
        %1165 = vmatpush1.bf16.msra.mxu0 0
        %1166 = vmatprep.subr.bf16.mxu0 0
        %1167 = vmatpush1.bf16.msra.mxu0 0
        %1168 = vmatprep.subr.bf16.mxu0 0
        %1169 = vmatpush1.bf16.msra.mxu0 0
        %1170 = vmatprep.subr.bf16.mxu0 0
        %1171 = vmatpush1.bf16.msra.mxu0 0
        %1172 = vmatprep.subr.bf16.mxu0 0
        %1173 = vmatpush1.bf16.msra.mxu0 0
        %1174 = vmatprep.subr.bf16.mxu0 0
        %1175 = vmatpush1.bf16.msra.mxu0 0
        %1176 = vmatprep.mubr.bf16.mxu0 0
        %1177 = vmatmul.mubr.bf16.gmra.mrb[0].mxu0 %v1139
        %v1178 = vpop.f32.mrb[0].mxu0
        %v1179 = vadd.f32 0.0, %v1178
        %v1180 = vpop.f32.mrb[0].mxu0
        %v1181 = vpop.f32.mrb[0].mxu0
        %v1182 = vpop.f32.mrb[0].mxu0
        %1183 = vdwg.mxu0
        %v1184 = vmul.f32 %v1179, %v1134
        %1186 = vrot.lane.b32.xlu0 %v1184, 32
        %v1187 = vpop.permute.xlu0 %1186
        %vm1189 = vcmask 326912
        %1190 = vst.msk [vmem:[#allocation2] sm:$0xff] %vm1189, %v1187
        %1191 = vrot.lane.b32.xlu0 %v599, 88
        %v1192 = vpop.permute.xlu0 %1191
        %1193 = vrot.lane.b32.xlu0 %v600, 88
        %v1194 = vpop.permute.xlu0 %1193
        %v1196 = vsel %vm602, %v1192, 0
        %v1199 = vsel %vm602, %v1194, 0
        %1201 = vmatprep.subr.bf16.mxu0 0
        %1202 = vmatpush1.bf16.xpose.msra.mxu0 %v1199
        %1203 = vmatprep.subr.bf16.mxu0 0
        %1204 = vmatpush1.bf16.xpose.msra.mxu0 0
        %1205 = vmatprep.subr.bf16.mxu0 0
        %1206 = vmatpush1.bf16.xpose.msra.mxu0 0
        %1207 = vmatprep.subr.bf16.mxu0 0
        %1208 = vmatpush1.bf16.xpose.msra.mxu0 0
        %1209 = vmatprep.subr.bf16.mxu0 0
        %1210 = vmatpush1.bf16.xpose.msra.mxu0 0
        %1211 = vmatprep.subr.bf16.mxu0 0
        %1212 = vmatpush1.bf16.xpose.msra.mxu0 0
        %1213 = vmatprep.subr.bf16.mxu0 0
        %1214 = vmatpush1.bf16.xpose.msra.mxu0 0
        %1215 = vmatprep.subr.bf16.mxu0 0
        %1216 = vmatpush1.bf16.xpose.msra.mxu0 0
        %1217 = vmatprep.subr.bf16.mxu0 0
        %1218 = vmatpush1.bf16.xpose.msra.mxu0 0
        %1219 = vmatprep.subr.bf16.mxu0 0
        %1220 = vmatpush1.bf16.xpose.msra.mxu0 0
        %1221 = vmatprep.subr.bf16.mxu0 0
        %1222 = vmatpush1.bf16.xpose.msra.mxu0 0
        %1223 = vmatprep.subr.bf16.mxu0 0
        %1224 = vmatpush1.bf16.xpose.msra.mxu0 0
        %1225 = vmatprep.subr.bf16.mxu0 0
        %1226 = vmatpush1.bf16.xpose.msra.mxu0 0
        %1227 = vmatprep.subr.bf16.mxu0 0
        %1228 = vmatpush1.bf16.xpose.msra.mxu0 0
        %1229 = vmatprep.subr.bf16.mxu0 0
        %1230 = vmatpush1.bf16.xpose.msra.mxu0 0
        %1231 = vmatprep.subr.bf16.mxu0 0
        %1232 = vmatpush1.bf16.xpose.msra.mxu0 0
        %1233 = vmatprep.mubr.bf16.mxu0 0
        %1234 = vmatmul.mubr.bf16.gmra.mrb[0].mxu0 %v1196
        %v1235 = vpop.f32.mrb[0].mxu0
        %v1236 = vadd.f32 0.0, %v1235
        %v1237 = vpop.f32.mrb[0].mxu0
        %v1238 = vpop.f32.mrb[0].mxu0
        %v1239 = vpop.f32.mrb[0].mxu0
        %1240 = vdwg.mxu0
        %v1241 = vsel %vm602, %v1236, -inf
        %1242 = vmax.xlane.f32.xlu0 %v1241
        %v1243 = vpop.xlane.xlu0 %1242
        %v1244 = vsub.f32 %v1236, %v1243
        %v1245 = vmul.f32 %v1244, 1.442695
        %v1246 = vpow.pop %v1245
        %v1247 = vsel %vm602, %v1246, 0.0
        %1248 = vadd.xlane.f32.xlu0 %v1247
        %v1249 = vpop.xlane.xlu0 %1248
        %v1250 = vrcp.pop %v1249
        %v1251 = vmul.f32 %v1249, %v1250
        %v1252 = vsub.f32 2.0, %v1251
        %v1253 = vmul.f32 %v1250, %v1252
        %v1254 = vpack.c.bf16 %v1246, %v1246
        %1255 = vrot.lane.b32.xlu0 %v601, 88
        %v1256 = vpop.permute.xlu0 %1255
        %v1258 = vsel %vm602, %v1254, 0
        %v1261 = vsel %vm666, %v1256, 0
        %1263 = vmatprep.subr.bf16.mxu0 0
        %1264 = vmatpush1.bf16.msra.mxu0 %v1261
        %1265 = vmatprep.subr.bf16.mxu0 0
        %1266 = vmatpush1.bf16.msra.mxu0 0
        %1267 = vmatprep.subr.bf16.mxu0 0
        %1268 = vmatpush1.bf16.msra.mxu0 0
        %1269 = vmatprep.subr.bf16.mxu0 0
        %1270 = vmatpush1.bf16.msra.mxu0 0
        %1271 = vmatprep.subr.bf16.mxu0 0
        %1272 = vmatpush1.bf16.msra.mxu0 0
        %1273 = vmatprep.subr.bf16.mxu0 0
        %1274 = vmatpush1.bf16.msra.mxu0 0
        %1275 = vmatprep.subr.bf16.mxu0 0
        %1276 = vmatpush1.bf16.msra.mxu0 0
        %1277 = vmatprep.subr.bf16.mxu0 0
        %1278 = vmatpush1.bf16.msra.mxu0 0
        %1279 = vmatprep.subr.bf16.mxu0 0
        %1280 = vmatpush1.bf16.msra.mxu0 0
        %1281 = vmatprep.subr.bf16.mxu0 0
        %1282 = vmatpush1.bf16.msra.mxu0 0
        %1283 = vmatprep.subr.bf16.mxu0 0
        %1284 = vmatpush1.bf16.msra.mxu0 0
        %1285 = vmatprep.subr.bf16.mxu0 0
        %1286 = vmatpush1.bf16.msra.mxu0 0
        %1287 = vmatprep.subr.bf16.mxu0 0
        %1288 = vmatpush1.bf16.msra.mxu0 0
        %1289 = vmatprep.subr.bf16.mxu0 0
        %1290 = vmatpush1.bf16.msra.mxu0 0
        %1291 = vmatprep.subr.bf16.mxu0 0
        %1292 = vmatpush1.bf16.msra.mxu0 0
        %1293 = vmatprep.subr.bf16.mxu0 0
        %1294 = vmatpush1.bf16.msra.mxu0 0
        %1295 = vmatprep.mubr.bf16.mxu0 0
        %1296 = vmatmul.mubr.bf16.gmra.mrb[0].mxu0 %v1258
        %v1297 = vpop.f32.mrb[0].mxu0
        %v1298 = vadd.f32 0.0, %v1297
        %v1299 = vpop.f32.mrb[0].mxu0
        %v1300 = vpop.f32.mrb[0].mxu0
        %v1301 = vpop.f32.mrb[0].mxu0
        %1302 = vdwg.mxu0
        %v1303 = vmul.f32 %v1298, %v1253
        %1305 = vrot.lane.b32.xlu0 %v1303, 40
        %v1306 = vpop.permute.xlu0 %1305
        %vm1308 = vcmask 392512
        %1309 = vst.msk [vmem:[#allocation2] sm:$0xff] %vm1308, %v1306
        %1310 = vrot.lane.b32.xlu0 %v599, 80
        %v1311 = vpop.permute.xlu0 %1310
        %1312 = vrot.lane.b32.xlu0 %v600, 80
        %v1313 = vpop.permute.xlu0 %1312
        %v1315 = vsel %vm602, %v1311, 0
        %v1318 = vsel %vm602, %v1313, 0
        %1320 = vmatprep.subr.bf16.mxu0 0
        %1321 = vmatpush1.bf16.xpose.msra.mxu0 %v1318
        %1322 = vmatprep.subr.bf16.mxu0 0
        %1323 = vmatpush1.bf16.xpose.msra.mxu0 0
        %1324 = vmatprep.subr.bf16.mxu0 0
        %1325 = vmatpush1.bf16.xpose.msra.mxu0 0
        %1326 = vmatprep.subr.bf16.mxu0 0
        %1327 = vmatpush1.bf16.xpose.msra.mxu0 0
        %1328 = vmatprep.subr.bf16.mxu0 0
        %1329 = vmatpush1.bf16.xpose.msra.mxu0 0
        %1330 = vmatprep.subr.bf16.mxu0 0
        %1331 = vmatpush1.bf16.xpose.msra.mxu0 0
        %1332 = vmatprep.subr.bf16.mxu0 0
        %1333 = vmatpush1.bf16.xpose.msra.mxu0 0
        %1334 = vmatprep.subr.bf16.mxu0 0
        %1335 = vmatpush1.bf16.xpose.msra.mxu0 0
        %1336 = vmatprep.subr.bf16.mxu0 0
        %1337 = vmatpush1.bf16.xpose.msra.mxu0 0
        %1338 = vmatprep.subr.bf16.mxu0 0
        %1339 = vmatpush1.bf16.xpose.msra.mxu0 0
        %1340 = vmatprep.subr.bf16.mxu0 0
        %1341 = vmatpush1.bf16.xpose.msra.mxu0 0
        %1342 = vmatprep.subr.bf16.mxu0 0
        %1343 = vmatpush1.bf16.xpose.msra.mxu0 0
        %1344 = vmatprep.subr.bf16.mxu0 0
        %1345 = vmatpush1.bf16.xpose.msra.mxu0 0
        %1346 = vmatprep.subr.bf16.mxu0 0
        %1347 = vmatpush1.bf16.xpose.msra.mxu0 0
        %1348 = vmatprep.subr.bf16.mxu0 0
        %1349 = vmatpush1.bf16.xpose.msra.mxu0 0
        %1350 = vmatprep.subr.bf16.mxu0 0
        %1351 = vmatpush1.bf16.xpose.msra.mxu0 0
        %1352 = vmatprep.mubr.bf16.mxu0 0
        %1353 = vmatmul.mubr.bf16.gmra.mrb[0].mxu0 %v1315
        %v1354 = vpop.f32.mrb[0].mxu0
        %v1355 = vadd.f32 0.0, %v1354
        %v1356 = vpop.f32.mrb[0].mxu0
        %v1357 = vpop.f32.mrb[0].mxu0
        %v1358 = vpop.f32.mrb[0].mxu0
        %1359 = vdwg.mxu0
        %v1360 = vsel %vm602, %v1355, -inf
        %1361 = vmax.xlane.f32.xlu0 %v1360
        %v1362 = vpop.xlane.xlu0 %1361
        %v1363 = vsub.f32 %v1355, %v1362
        %v1364 = vmul.f32 %v1363, 1.442695
        %v1365 = vpow.pop %v1364
        %v1366 = vsel %vm602, %v1365, 0.0
        %1367 = vadd.xlane.f32.xlu0 %v1366
        %v1368 = vpop.xlane.xlu0 %1367
        %v1369 = vrcp.pop %v1368
        %v1370 = vmul.f32 %v1368, %v1369
        %v1371 = vsub.f32 2.0, %v1370
        %v1372 = vmul.f32 %v1369, %v1371
        %v1373 = vpack.c.bf16 %v1365, %v1365
        %1374 = vrot.lane.b32.xlu0 %v601, 80
        %v1375 = vpop.permute.xlu0 %1374
        %v1377 = vsel %vm602, %v1373, 0
        %v1380 = vsel %vm666, %v1375, 0
        %1382 = vmatprep.subr.bf16.mxu0 0
        %1383 = vmatpush1.bf16.msra.mxu0 %v1380
        %1384 = vmatprep.subr.bf16.mxu0 0
        %1385 = vmatpush1.bf16.msra.mxu0 0
        %1386 = vmatprep.subr.bf16.mxu0 0
        %1387 = vmatpush1.bf16.msra.mxu0 0
        %1388 = vmatprep.subr.bf16.mxu0 0
        %1389 = vmatpush1.bf16.msra.mxu0 0
        %1390 = vmatprep.subr.bf16.mxu0 0
        %1391 = vmatpush1.bf16.msra.mxu0 0
        %1392 = vmatprep.subr.bf16.mxu0 0
        %1393 = vmatpush1.bf16.msra.mxu0 0
        %1394 = vmatprep.subr.bf16.mxu0 0
        %1395 = vmatpush1.bf16.msra.mxu0 0
        %1396 = vmatprep.subr.bf16.mxu0 0
        %1397 = vmatpush1.bf16.msra.mxu0 0
        %1398 = vmatprep.subr.bf16.mxu0 0
        %1399 = vmatpush1.bf16.msra.mxu0 0
        %1400 = vmatprep.subr.bf16.mxu0 0
        %1401 = vmatpush1.bf16.msra.mxu0 0
        %1402 = vmatprep.subr.bf16.mxu0 0
        %1403 = vmatpush1.bf16.msra.mxu0 0
        %1404 = vmatprep.subr.bf16.mxu0 0
        %1405 = vmatpush1.bf16.msra.mxu0 0
        %1406 = vmatprep.subr.bf16.mxu0 0
        %1407 = vmatpush1.bf16.msra.mxu0 0
        %1408 = vmatprep.subr.bf16.mxu0 0
        %1409 = vmatpush1.bf16.msra.mxu0 0
        %1410 = vmatprep.subr.bf16.mxu0 0
        %1411 = vmatpush1.bf16.msra.mxu0 0
        %1412 = vmatprep.subr.bf16.mxu0 0
        %1413 = vmatpush1.bf16.msra.mxu0 0
        %1414 = vmatprep.mubr.bf16.mxu0 0
        %1415 = vmatmul.mubr.bf16.gmra.mrb[0].mxu0 %v1377
        %v1416 = vpop.f32.mrb[0].mxu0
        %v1417 = vadd.f32 0.0, %v1416
        %v1418 = vpop.f32.mrb[0].mxu0
        %v1419 = vpop.f32.mrb[0].mxu0
        %v1420 = vpop.f32.mrb[0].mxu0
        %1421 = vdwg.mxu0
        %v1422 = vmul.f32 %v1417, %v1372
        %1424 = vrot.lane.b32.xlu0 %v1422, 48
        %v1425 = vpop.permute.xlu0 %1424
        %vm1427 = vcmask 458112
        %1428 = vst.msk [vmem:[#allocation2] sm:$0xff] %vm1427, %v1425
        %1429 = vrot.lane.b32.xlu0 %v599, 72
        %v1430 = vpop.permute.xlu0 %1429
        %1431 = vrot.lane.b32.xlu0 %v600, 72
        %v1432 = vpop.permute.xlu0 %1431
        %v1434 = vsel %vm602, %v1430, 0
        %v1437 = vsel %vm602, %v1432, 0
        %1439 = vmatprep.subr.bf16.mxu0 0
        %1440 = vmatpush1.bf16.xpose.msra.mxu0 %v1437
        %1441 = vmatprep.subr.bf16.mxu0 0
        %1442 = vmatpush1.bf16.xpose.msra.mxu0 0
        %1443 = vmatprep.subr.bf16.mxu0 0
        %1444 = vmatpush1.bf16.xpose.msra.mxu0 0
        %1445 = vmatprep.subr.bf16.mxu0 0
        %1446 = vmatpush1.bf16.xpose.msra.mxu0 0
        %1447 = vmatprep.subr.bf16.mxu0 0
        %1448 = vmatpush1.bf16.xpose.msra.mxu0 0
        %1449 = vmatprep.subr.bf16.mxu0 0
        %1450 = vmatpush1.bf16.xpose.msra.mxu0 0
        %1451 = vmatprep.subr.bf16.mxu0 0
        %1452 = vmatpush1.bf16.xpose.msra.mxu0 0
        %1453 = vmatprep.subr.bf16.mxu0 0
        %1454 = vmatpush1.bf16.xpose.msra.mxu0 0
        %1455 = vmatprep.subr.bf16.mxu0 0
        %1456 = vmatpush1.bf16.xpose.msra.mxu0 0
        %1457 = vmatprep.subr.bf16.mxu0 0
        %1458 = vmatpush1.bf16.xpose.msra.mxu0 0
        %1459 = vmatprep.subr.bf16.mxu0 0
        %1460 = vmatpush1.bf16.xpose.msra.mxu0 0
        %1461 = vmatprep.subr.bf16.mxu0 0
        %1462 = vmatpush1.bf16.xpose.msra.mxu0 0
        %1463 = vmatprep.subr.bf16.mxu0 0
        %1464 = vmatpush1.bf16.xpose.msra.mxu0 0
        %1465 = vmatprep.subr.bf16.mxu0 0
        %1466 = vmatpush1.bf16.xpose.msra.mxu0 0
        %1467 = vmatprep.subr.bf16.mxu0 0
        %1468 = vmatpush1.bf16.xpose.msra.mxu0 0
        %1469 = vmatprep.subr.bf16.mxu0 0
        %1470 = vmatpush1.bf16.xpose.msra.mxu0 0
        %1471 = vmatprep.mubr.bf16.mxu0 0
        %1472 = vmatmul.mubr.bf16.gmra.mrb[0].mxu0 %v1434
        %v1473 = vpop.f32.mrb[0].mxu0
        %v1474 = vadd.f32 0.0, %v1473
        %v1475 = vpop.f32.mrb[0].mxu0
        %v1476 = vpop.f32.mrb[0].mxu0
        %v1477 = vpop.f32.mrb[0].mxu0
        %1478 = vdwg.mxu0
        %v1479 = vsel %vm602, %v1474, -inf
        %1480 = vmax.xlane.f32.xlu0 %v1479
        %v1481 = vpop.xlane.xlu0 %1480
        %v1482 = vsub.f32 %v1474, %v1481
        %v1483 = vmul.f32 %v1482, 1.442695
        %v1484 = vpow.pop %v1483
        %v1485 = vsel %vm602, %v1484, 0.0
        %1486 = vadd.xlane.f32.xlu0 %v1485
        %v1487 = vpop.xlane.xlu0 %1486
        %v1488 = vrcp.pop %v1487
        %v1489 = vmul.f32 %v1487, %v1488
        %v1490 = vsub.f32 2.0, %v1489
        %v1491 = vmul.f32 %v1488, %v1490
        %v1492 = vpack.c.bf16 %v1484, %v1484
        %1493 = vrot.lane.b32.xlu0 %v601, 72
        %v1494 = vpop.permute.xlu0 %1493
        %v1496 = vsel %vm602, %v1492, 0
        %v1499 = vsel %vm666, %v1494, 0
        %1501 = vmatprep.subr.bf16.mxu0 0
        %1502 = vmatpush1.bf16.msra.mxu0 %v1499
        %1503 = vmatprep.subr.bf16.mxu0 0
        %1504 = vmatpush1.bf16.msra.mxu0 0
        %1505 = vmatprep.subr.bf16.mxu0 0
        %1506 = vmatpush1.bf16.msra.mxu0 0
        %1507 = vmatprep.subr.bf16.mxu0 0
        %1508 = vmatpush1.bf16.msra.mxu0 0
        %1509 = vmatprep.subr.bf16.mxu0 0
        %1510 = vmatpush1.bf16.msra.mxu0 0
        %1511 = vmatprep.subr.bf16.mxu0 0
        %1512 = vmatpush1.bf16.msra.mxu0 0
        %1513 = vmatprep.subr.bf16.mxu0 0
        %1514 = vmatpush1.bf16.msra.mxu0 0
        %1515 = vmatprep.subr.bf16.mxu0 0
        %1516 = vmatpush1.bf16.msra.mxu0 0
        %1517 = vmatprep.subr.bf16.mxu0 0
        %1518 = vmatpush1.bf16.msra.mxu0 0
        %1519 = vmatprep.subr.bf16.mxu0 0
        %1520 = vmatpush1.bf16.msra.mxu0 0
        %1521 = vmatprep.subr.bf16.mxu0 0
        %1522 = vmatpush1.bf16.msra.mxu0 0
        %1523 = vmatprep.subr.bf16.mxu0 0
        %1524 = vmatpush1.bf16.msra.mxu0 0
        %1525 = vmatprep.subr.bf16.mxu0 0
        %1526 = vmatpush1.bf16.msra.mxu0 0
        %1527 = vmatprep.subr.bf16.mxu0 0
        %1528 = vmatpush1.bf16.msra.mxu0 0
        %1529 = vmatprep.subr.bf16.mxu0 0
        %1530 = vmatpush1.bf16.msra.mxu0 0
        %1531 = vmatprep.subr.bf16.mxu0 0
        %1532 = vmatpush1.bf16.msra.mxu0 0
        %1533 = vmatprep.mubr.bf16.mxu0 0
        %1534 = vmatmul.mubr.bf16.gmra.mrb[0].mxu0 %v1496
        %v1535 = vpop.f32.mrb[0].mxu0
        %v1536 = vadd.f32 0.0, %v1535
        %v1537 = vpop.f32.mrb[0].mxu0
        %v1538 = vpop.f32.mrb[0].mxu0
        %v1539 = vpop.f32.mrb[0].mxu0
        %1540 = vdwg.mxu0
        %v1541 = vmul.f32 %v1536, %v1491
        %1543 = vrot.lane.b32.xlu0 %v1541, 56
        %v1544 = vpop.permute.xlu0 %1543
        %vm1546 = vcmask 523712
        %1547 = vst.msk [vmem:[#allocation2] sm:$0xff] %vm1546, %v1544
        %v1548 = vld [vmem:[#allocation2] sm:$0xff]
        %v1549 = vpack.c.bf16 %v1548, %v1548
        %v1550 = vld [vmem:[%s5] sm:$0x1]
        %v1552 = vlaneseq
        %v1553 = vshrl.u32 %v1552, 7
        %v1554 = vsub.s32 0, %v1553
        %v1555 = vrot.slane %v1550, %v1554
        %v1565 = vunpack.c.l.b16 %v395
        %v1566 = vunpack.c.l.b16 %v396
        %v1567 = vunpack.c.l.b16 %v397
        %v1568 = vunpack.c.l.b16 %v398
        %v1569 = vunpack.c.l.b16 %v399
        %v1570 = vunpack.c.l.b16 %v400
        %v1571 = vunpack.c.l.b16 %v401
        %v1572 = vunpack.c.l.b16 %v402
        %v1573 = vpack.c.b16 %v1566, %v1565
        %v1574 = vpack.c.b16 %v1568, %v1567
        %v1575 = vpack.c.b16 %v1570, %v1569
        %v1576 = vpack.c.b16 %v1572, %v1571
        %v1582 = vsel %vm427, %v1549, 0
        %1584 = vmatprep.subr.bf16.mxu0 0
        %1585 = vmatpush1.bf16.msra.mxu0 %v1573
        %1586 = vmatprep.subr.bf16.mxu0 0
        %1587 = vmatpush1.bf16.msra.mxu0 %v1574
        %1588 = vmatprep.subr.bf16.mxu0 0
        %1589 = vmatpush1.bf16.msra.mxu0 %v1575
        %1590 = vmatprep.subr.bf16.mxu0 0
        %1591 = vmatpush1.bf16.msra.mxu0 %v1576
        %1592 = vmatprep.subr.bf16.mxu0 0
        %1593 = vmatpush1.bf16.msra.mxu0 0
        %1594 = vmatprep.subr.bf16.mxu0 0
        %1595 = vmatpush1.bf16.msra.mxu0 0
        %1596 = vmatprep.subr.bf16.mxu0 0
        %1597 = vmatpush1.bf16.msra.mxu0 0
        %1598 = vmatprep.subr.bf16.mxu0 0
        %1599 = vmatpush1.bf16.msra.mxu0 0
        %1600 = vmatprep.subr.bf16.mxu0 0
        %1601 = vmatpush1.bf16.msra.mxu0 0
        %1602 = vmatprep.subr.bf16.mxu0 0
        %1603 = vmatpush1.bf16.msra.mxu0 0
        %1604 = vmatprep.subr.bf16.mxu0 0
        %1605 = vmatpush1.bf16.msra.mxu0 0
        %1606 = vmatprep.subr.bf16.mxu0 0
        %1607 = vmatpush1.bf16.msra.mxu0 0
        %1608 = vmatprep.subr.bf16.mxu0 0
        %1609 = vmatpush1.bf16.msra.mxu0 0
        %1610 = vmatprep.subr.bf16.mxu0 0
        %1611 = vmatpush1.bf16.msra.mxu0 0
        %1612 = vmatprep.subr.bf16.mxu0 0
        %1613 = vmatpush1.bf16.msra.mxu0 0
        %1614 = vmatprep.subr.bf16.mxu0 0
        %1615 = vmatpush1.bf16.msra.mxu0 0
        %1616 = vmatprep.mubr.bf16.mxu0 0
        %1617 = vmatmul.mubr.bf16.gmra.mrb[0].mxu0 %v1582
        %v1618 = vpop.f32.mrb[0].mxu0
        %v1619 = vadd.f32 %v1555, %v1618
        %v1620 = vpop.f32.mrb[0].mxu0
        %v1621 = vpop.f32.mrb[0].mxu0
        %v1622 = vpop.f32.mrb[0].mxu0
        %1623 = vdwg.mxu0
        %1624 = vst.msk [vmem:[%s368] sm:$0xff] %vm427, %v1619
        %s1625 = sand.u32 %s196, 1
        %s1626 = scalar_lea.sflag [#allocation5], %s1625
        %s1627 = sand.u32 %s196, 1
        %s1628 = smul.addr %s1627, 8
        %s1629 = scalar_lea.vmem [#allocation12], %s1628
        // Predicated region
        $region65: #{tpu_custom_call.1} parent=43 // pred_check
          %p1630 = pneg %p206
        $region66: #{tpu_custom_call.1} parent=43 // pred_check_branch
          %1632 = sbr.rel (%p1630) target = $region68
        $region67: #{tpu_custom_call.1} parent=43 // pred_region
          %s1634 = ssub.s32 128, 128
          %1635 = vsyncadd %s1626, %s1634
          %s1636 = smul.addr %s29, 128
          %s1637 = scalar_lea.hbm %s6, %s1636
          %s1639 = sshll.u32 %s1629, 4
          %s1640 = int_to_ptr.vmem [resolvable:$true] %s1639
          %1642 = dma.vmem_to_hbm [thread:$0]  %s1640, 128, %s1637, %s1626
        $region68: #{tpu_custom_call.1} parent=43 // pred_fallthru
          _
      $region44: #{tpu_custom_call.1} parent=5 // pred_fallthru
        _
      %p1643 = scmp.le.s32.totalorder 2, %s20
      // Predicated region
      $region69: #{tpu_custom_call.1} parent=5 // pred_check
        %p1644 = pneg %p1643
      $region70: #{tpu_custom_call.1} parent=5 // pred_check_branch
        %1646 = sbr.rel (%p1644) target = $region72
      $region71: #{tpu_custom_call.1} parent=5 // pred_region
        %s1647 = ssub.s32 %s20, 2
        // Predicated region
        $region73: #{tpu_custom_call.1} parent=71 // pred_check
          %p1648 = pneg %p212
        $region74: #{tpu_custom_call.1} parent=71 // pred_check_branch
          %1650 = sbr.rel (%p1648) target = $region76
        $region75: #{tpu_custom_call.1} parent=71 // pred_region
          %s1651 = sand.u32 %s197, 1
          %s1652 = scalar_lea.sflag [#allocation5], %s1651
          %s1653 = sand.u32 %s197, 1
          %s1654 = smul.addr %s1653, 8
          %s1655 = scalar_lea.vmem [#allocation12], %s1654
          %1656 = dma.done %s1652, 128
        $region76: #{tpu_custom_call.1} parent=71 // pred_fallthru
          _
      $region72: #{tpu_custom_call.1} parent=5 // pred_fallthru
        _
    $region6: #{tpu_custom_call.1} parent=1 // loop_footer
      %s24 = sadd.s32 1, %s20
    $region7: #{tpu_custom_call.1} parent=1 // loop_footer_branch
      %19 = sbr.rel target = $region3
    $region8: #{tpu_custom_call.1} parent=1 // loop_exit
      _
    %1657 = vsyncpa [#allocation4], 1
    %s1658 = scalar_lea.sflag [#allocation4], 1
    %1659 = vsyncpa %s1658, 1
    %1660 = vsyncpa [#allocation7], 1
    %1661 = vsyncpa [#allocation10], 1
    %1662 = vsyncpa [#allocation5], 1
    %s1663 = scalar_lea.sflag [#allocation5], 1
    %1664 = vsyncpa %s1663, 1

</llo_original>
